<compile_context>
chip_gen: v5e
topology: v5e:2x2
jax: 0.10.0
libtpu: 0.0.40
codegen_flags: <defaults>
</compile_context>

<pallas_src>
import functools

import jax
import jax.numpy as jnp
from jax import lax
from jax.experimental import pallas as pl
from jax.experimental.pallas import tpu as pltpu


def _round_up(x, m):
    return ((x + m - 1) // m) * m


def _pad_gate_cols(w, h, h_pad):
    """Pad each of the 4 gate blocks (i|f|g|o) along the last axis from h to h_pad."""
    if h_pad == h:
        return w
    lead = w.shape[:-1]
    w4 = w.reshape(*lead, 4, h)
    pads = [(0, 0)] * len(lead) + [(0, 0), (0, h_pad - h)]
    return jnp.pad(w4, pads).reshape(*lead, 4 * h_pad)


def _cores_per_chip():
    """Best-effort TensorCore count per chip (2 on v7x, 1 on v5e/v6e)."""
    try:
        kind = jax.devices()[0].device_kind.lower()
        if "v7" in kind:
            return 2
    except Exception:
        pass
    return 1


def _vmem_capacity_bytes():
    try:
        return int(pltpu.get_tpu_info().vmem_capacity_bytes)
    except Exception:
        return 64 * 1024 * 1024   # conservative: v7x per-TC VMEM


def _lstm_fc_kernel(emb_ref, wih_ref, whh_ref, b_ref, wfc_ref, bfc_ref, out_ref,
                    xg_sc, h_sc, c_sc, *, hidden, time_chunk, pad_steps):
    """One grid step = `time_chunk` LSTM timesteps for one batch block.

    emb_ref : (TT, Bb, E_pad)  bf16 embedding tile (time-major)
    wih_ref : (E_pad, 4H)      bf16 input-projection weights (resident)
    whh_ref : (H, 4H)          bf16 recurrent weights (resident)
    b_ref   : (1, 4H)          f32  b_ih + b_hh
    wfc_ref : (H, O)           bf16 classifier weights (resident)
    bfc_ref : (1, O)           f32  classifier bias
    out_ref : (Bb, O)          f32  logits (written on the last time chunk)
    xg_sc   : (TT, Bb, 4H)     f32  per-chunk input projection scratch
    h_sc/c_sc: (Bb, H)         f32  carried LSTM state
    """
    t_chunk = pl.program_id(1)

    @pl.when(t_chunk == 0)
    def _():
        h_sc[...] = jnp.zeros_like(h_sc)
        c_sc[...] = jnp.zeros_like(c_sc)

    H = hidden
    TT = time_chunk
    Bb = emb_ref.shape[1]
    Ep = emb_ref.shape[2]

    # Input projection for the whole chunk: one big bf16 MXU matmul (f32 accumulate),
    # off the per-timestep serial path.
    x2d = emb_ref[...].reshape(TT * Bb, Ep)
    xg = jnp.dot(x2d, wih_ref[...], preferred_element_type=jnp.float32) + b_ref[...]
    xg_sc[...] = xg.reshape(TT, Bb, 4 * H)

    def sig(x):
        # logistic via tanh: a single EUP pass + cheap VPU mul/add
        return 0.5 * (jnp.tanh(0.5 * x) + 1.0)

    t0 = t_chunk * TT

    def step(i, carry):
        h, c = carry
        # Only the recurrent matmul sits on the serial critical path.
        gates = xg_sc[i] + jnp.dot(h.astype(jnp.bfloat16), whh_ref[...],
                                   preferred_element_type=jnp.float32)
        # Lane-aligned gate slices (H is a multiple of 128); PyTorch order i,f,g,o.
        i_g = sig(gates[:, 0 * H:1 * H])
        f_g = sig(gates[:, 1 * H:2 * H])
        g_g = jnp.tanh(gates[:, 2 * H:3 * H])
        o_g = sig(gates[:, 3 * H:4 * H])
        c_new = f_g * c + i_g * g_g
        h_new = o_g * jnp.tanh(c_new)
        if pad_steps > 0:
            # Prepended pad timesteps: keep the (zero) state untouched.
            valid = (t0 + i) >= pad_steps
            h_new = jnp.where(valid, h_new, h)
            c_new = jnp.where(valid, c_new, c)
        return (h_new, c_new)

    h, c = lax.fori_loop(0, TT, step, (h_sc[...], c_sc[...]), unroll=True)
    h_sc[...] = h
    c_sc[...] = c

    @pl.when(t_chunk == pl.num_programs(1) - 1)
    def _():
        # NOTE: for very wide classifiers (O_pad >> 128) this FC should be tiled on a
        # third grid axis or moved to its own call so W_fc is not resident all along.
        out_ref[...] = (
            jnp.dot(h.astype(jnp.bfloat16), wfc_ref[...],
                    preferred_element_type=jnp.float32)
            + bfc_ref[...]
        ).astype(out_ref.dtype)


def lstm_classifier_forward(input_ids, params, *, max_time_chunk=8, batch_block=None):
    """input_ids: int32 [B, T] (batch_first). Returns logits [B, output_dim]."""
    emb_table = params["embedding"]          # [V, E]
    w_ih = params["w_ih"]                    # [E, 4H]   (transposed vs PyTorch)
    w_hh = params["w_hh"]                    # [H, 4H]
    b = params["b"]                          # [1, 4H]   (b_ih + b_hh)
    w_fc = params["w_fc"]                    # [H, O]
    b_fc = params["b_fc"]                    # [1, O]

    B, T = input_ids.shape
    E = emb_table.shape[1]
    H = w_hh.shape[0]
    O = w_fc.shape[1]

    # Lane/sublane-aligned padded sizes. Padded rows/cols are exactly zero, so padded
    # gate lanes give i=f=o=0.5, g=0 -> padded h,c lanes stay 0 forever and never
    # contaminate real lanes through the zero-padded W_hh / W_fc rows.
    H_pad = _round_up(H, 128)
    E_pad = _round_up(E, 128)
    B_pad = _round_up(B, 8)
    O_pad = _round_up(O, 128)

    # bf16 matmul operands (MXU-native on all generations); biases stay f32.
    w_ih_p = jnp.pad(_pad_gate_cols(w_ih, H, H_pad),
                     ((0, E_pad - E), (0, 0))).astype(jnp.bfloat16)       # (E_pad, 4H_pad)
    w_hh_p = jnp.pad(_pad_gate_cols(w_hh, H, H_pad),
                     ((0, H_pad - H), (0, 0))).astype(jnp.bfloat16)       # (H_pad, 4H_pad)
    b_p = _pad_gate_cols(b, H, H_pad).astype(jnp.float32)                 # (1, 4H_pad)
    w_fc_p = jnp.pad(w_fc, ((0, H_pad - H),
                            (0, O_pad - O))).astype(jnp.bfloat16)         # (H_pad, O_pad)
    b_fc_p = jnp.pad(b_fc, ((0, 0), (0, O_pad - O))).astype(jnp.float32)  # (1, O_pad)

    # Time chunking: prepend zero-state-preserving pad steps so T always factors into
    # chunks of size tt (avoids the 1-timestep-per-grid-step degenerate case).
    tt = min(max_time_chunk, T)
    T_pad = _round_up(T, tt)
    pad_steps = T_pad - T
    n_t = T_pad // tt

    # Time-major embedding gather directly (no [B,T,E]->[T,B,E] transpose pass); bf16 stream.
    emb_tm = emb_table.astype(jnp.bfloat16)[input_ids.T]                  # [T, B, E] bf16
    emb_tm = jnp.pad(emb_tm, ((pad_steps, 0), (0, B_pad - B), (0, E_pad - E)))

    # Batch blocks on a leading "parallel" axis. Split into 2 blocks only on v7x
    # (2 TensorCores/chip) and only when the batch is big enough to keep blocks 8-aligned.
    if batch_block is None:
        b_blk = B_pad
        if _cores_per_chip() >= 2 and B_pad >= 16 and (B_pad // 2) % 8 == 0:
            b_blk = B_pad // 2
    else:
        b_blk = batch_block
    assert B_pad % b_blk == 0 and b_blk % 8 == 0
    n_b = B_pad // b_blk

    # VMEM budget: compute the actual requirement and leave compiler headroom; never
    # request the entire physical VMEM (64 MiB per TensorCore on v7x).
    vmem_need = (
        2 * tt * b_blk * E_pad * 2            # double-buffered embedding stream (bf16)
        + E_pad * 4 * H_pad * 2               # W_ih (bf16, resident)
        + H_pad * 4 * H_pad * 2               # W_hh (bf16, resident)
        + H_pad * O_pad * 2                   # W_fc (bf16, resident)
        + 4 * H_pad * 4 + O_pad * 4           # biases (f32)
        + 2 * b_blk * O_pad * 4               # output block (double-buffered, f32)
        + tt * b_blk * 4 * H_pad * 4          # xg chunk scratch (f32)
        + 2 * b_blk * H_pad * 4               # h/c state scratch (f32)
    )
    vmem_limit = int(min(max(2 * vmem_need, 8 * 1024 * 1024),
                         int(0.75 * _vmem_capacity_bytes())))

    kernel = functools.partial(_lstm_fc_kernel, hidden=H_pad, time_chunk=tt,
                               pad_steps=pad_steps)

    out = pl.pallas_call(
        kernel,
        out_shape=jax.ShapeDtypeStruct((B_pad, O_pad), jnp.float32),
        grid_spec=pltpu.PrefetchScalarGridSpec(
            num_scalar_prefetch=0,
            grid=(n_b, n_t),
            in_specs=[
                pl.BlockSpec((tt, b_blk, E_pad), lambda bi, ti: (ti, bi, 0)),
                pl.BlockSpec((E_pad, 4 * H_pad), lambda bi, ti: (0, 0)),
                pl.BlockSpec((H_pad, 4 * H_pad), lambda bi, ti: (0, 0)),
                pl.BlockSpec((1, 4 * H_pad), lambda bi, ti: (0, 0)),
                pl.BlockSpec((H_pad, O_pad), lambda bi, ti: (0, 0)),
                pl.BlockSpec((1, O_pad), lambda bi, ti: (0, 0)),
            ],
            out_specs=pl.BlockSpec((b_blk, O_pad), lambda bi, ti: (bi, 0)),
            scratch_shapes=[
                pltpu.VMEM((tt, b_blk, 4 * H_pad), jnp.float32),   # per-chunk gates
                pltpu.VMEM((b_blk, H_pad), jnp.float32),           # h state
                pltpu.VMEM((b_blk, H_pad), jnp.float32),           # c state
            ],
        ),
        compiler_params=pltpu.CompilerParams(
            dimension_semantics=("parallel", "arbitrary"),
            vmem_limit_bytes=vmem_limit,
        ),
    )(emb_tm, w_ih_p, w_hh_p, b_p, w_fc_p, b_fc_p)

    return out[:B, :O]


def init_params(key, vocab_size, embedding_dim, hidden_dim, output_dim):
    ks = jax.random.split(key, 8)
    bound = 1.0 / jnp.sqrt(hidden_dim)
    emb = jax.random.normal(ks[0], (vocab_size, embedding_dim), jnp.float32)
    # PyTorch stores weight_ih: (4H, E), weight_hh: (4H, H); we keep them transposed.
    w_ih = jax.random.uniform(ks[1], (embedding_dim, 4 * hidden_dim),
                              jnp.float32, -bound, bound)
    w_hh = jax.random.uniform(ks[2], (hidden_dim, 4 * hidden_dim),
                              jnp.float32, -bound, bound)
    b_ih = jax.random.uniform(ks[3], (4 * hidden_dim,), jnp.float32, -bound, bound)
    b_hh = jax.random.uniform(ks[4], (4 * hidden_dim,), jnp.float32, -bound, bound)
    w_fc = jax.random.uniform(ks[5], (hidden_dim, output_dim),
                              jnp.float32, -bound, bound)
    b_fc = jax.random.uniform(ks[6], (output_dim,), jnp.float32, -bound, bound)
    return {
        "embedding": emb,
        "w_ih": w_ih,
        "w_hh": w_hh,
        "b": (b_ih + b_hh)[None, :],
        "w_fc": w_fc,
        "b_fc": b_fc[None, :],
    }


def _reference_forward(input_ids, params):
    """Pure-JAX f32 reference matching PyTorch nn.LSTM semantics."""
    emb = params["embedding"][input_ids]                    # [B, T, E]
    B, T, E = emb.shape
    H = params["w_hh"].shape[0]

    def step(carry, x_t):
        h, c = carry
        gates = x_t @ params["w_ih"] + h @ params["w_hh"] + params["b"][0]
        i = jax.nn.sigmoid(gates[:, 0 * H:1 * H])
        f = jax.nn.sigmoid(gates[:, 1 * H:2 * H])
        g = jnp.tanh(gates[:, 2 * H:3 * H])
        o = jax.nn.sigmoid(gates[:, 3 * H:4 * H])
        c = f * c + i * g
        h = o * jnp.tanh(c)
        return (h, c), None

    h0 = jnp.zeros((B, H), jnp.float32)
    c0 = jnp.zeros((B, H), jnp.float32)
    (h_last, _), _ = jax.lax.scan(step, (h0, c0), jnp.transpose(emb, (1, 0, 2)))
    return h_last @ params["w_fc"] + params["b_fc"]


if __name__ == "__main__":
    vocab_size, embedding_dim, hidden_dim, output_dim = 64, 16, 32, 2
    batch, seq = 2, 8

    key = jax.random.PRNGKey(0)
    k_params, k_ids = jax.random.split(key)
    params = init_params(k_params, vocab_size, embedding_dim, hidden_dim, output_dim)
    input_ids = jax.random.randint(k_ids, (batch, seq), 0, vocab_size, jnp.int32)

    logits = lstm_classifier_forward(input_ids, params)
    logits = jax.block_until_ready(logits)

    ref = _reference_forward(input_ids, params)
    assert logits.shape == (batch, output_dim)
    # Kernel uses bf16 MXU operands (f32 accumulate / f32 elementwise), so compare at
    # bf16-appropriate tolerance against the f32 reference.
    assert jnp.allclose(logits, ref, atol=2e-2, rtol=2e-2), "mismatch vs reference"

    print("KERNEL_OK")
</pallas_src>

<mosaic_0001>
module attributes {stable_mosaic.version = 11 : i64} {
  func.func @_lstm_fc_kernel(%arg0: i32, %arg1: i32, %arg2: memref<8x8x128xbf16, #tpu.memory_space<vmem>>, %arg3: memref<128x512xbf16, #tpu.memory_space<vmem>>, %arg4: memref<128x512xbf16, #tpu.memory_space<vmem>>, %arg5: memref<1x512xf32, #tpu.memory_space<vmem>>, %arg6: memref<128x128xbf16, #tpu.memory_space<vmem>>, %arg7: memref<1x128xf32, #tpu.memory_space<vmem>>, %arg8: memref<8x128xf32, #tpu.memory_space<vmem>>, %arg9: memref<8x8x512xf32, #tpu.memory_space<vmem>>, %arg10: memref<8x128xf32, #tpu.memory_space<vmem>>, %arg11: memref<8x128xf32, #tpu.memory_space<vmem>>) attributes {dimension_semantics = [#tpu.dimension_semantics<parallel>, #tpu.dimension_semantics<arbitrary>], iteration_bounds = array<i64: 1, 1>, scalar_prefetch = 0 : i64, scratch_operands = 3 : i64, tpu.core_type = #tpu.core_type<tc>, window_params = [{transform_indices = @transform_0, window_bounds = array<i64: 8, 8, 128>}, {pipeline_mode = #tpu.pipeline_mode<synchronous>, transform_indices = @transform_1, window_bounds = array<i64: 128, 512>}, {pipeline_mode = #tpu.pipeline_mode<synchronous>, transform_indices = @transform_2, window_bounds = array<i64: 128, 512>}, {pipeline_mode = #tpu.pipeline_mode<synchronous>, transform_indices = @transform_3, window_bounds = array<i64: 1, 512>}, {pipeline_mode = #tpu.pipeline_mode<synchronous>, transform_indices = @transform_4, window_bounds = array<i64: 128, 128>}, {pipeline_mode = #tpu.pipeline_mode<synchronous>, transform_indices = @transform_5, window_bounds = array<i64: 1, 128>}, {transform_indices = @transform_6, window_bounds = array<i64: 8, 128>}]} {
    %c0_i32 = arith.constant 0 : i32
    %0 = arith.cmpi eq, %arg1, %c0_i32 : i32
    %1 = arith.extui %0 : i1 to i32
    %c0_i32_0 = arith.constant 0 : i32
    %2 = arith.cmpi ne, %1, %c0_i32_0 : i32
    scf.if %2 {
      %cst_133 = arith.constant 0.000000e+00 : f32
      %323 = vector.broadcast %cst_133 : f32 to vector<8x128xf32>
      %c0_134 = arith.constant 0 : index
      %c0_135 = arith.constant 0 : index
      %324 = vector.load %arg10[%c0_134, %c0_135] : memref<8x128xf32, #tpu.memory_space<vmem>>, vector<8x128xf32>
      tpu.vector_store %arg10[%c0_134, %c0_135], %323 {strides = array<i32>} : memref<8x128xf32, #tpu.memory_space<vmem>>, vector<8x128xf32>,
      %cst_136 = arith.constant 0.000000e+00 : f32
      %325 = vector.broadcast %cst_136 : f32 to vector<8x128xf32>
      %c0_137 = arith.constant 0 : index
      %c0_138 = arith.constant 0 : index
      %326 = vector.load %arg11[%c0_137, %c0_138] : memref<8x128xf32, #tpu.memory_space<vmem>>, vector<8x128xf32>
      tpu.vector_store %arg11[%c0_137, %c0_138], %325 {strides = array<i32>} : memref<8x128xf32, #tpu.memory_space<vmem>>, vector<8x128xf32>,
    } else {
    }
    %c0 = arith.constant 0 : index
    %c0_1 = arith.constant 0 : index
    %c0_2 = arith.constant 0 : index
    %3 = vector.load %arg2[%c0, %c0_1, %c0_2] : memref<8x8x128xbf16, #tpu.memory_space<vmem>>, vector<8x8x128xbf16>
    %4 = vector.shape_cast %3 : vector<8x8x128xbf16> to vector<64x128xbf16>
    %c0_3 = arith.constant 0 : index
    %c0_4 = arith.constant 0 : index
    %5 = vector.load %arg3[%c0_3, %c0_4] : memref<128x512xbf16, #tpu.memory_space<vmem>>, vector<128x512xbf16>
    %cst = arith.constant dense<0.000000e+00> : vector<64x512xf32>
    %6 = tpu.matmul %4, %5, %cst {dimension_numbers = #tpu.dot_dimension_numbers<[1], [0], [0], [1], [0, 0, 1, 1], [], []>} : vector<64x128xbf16>, vector<128x512xbf16>, vector<64x512xf32> -> vector<64x512xf32>
    %c0_5 = arith.constant 0 : index
    %c0_6 = arith.constant 0 : index
    %7 = vector.load %arg5[%c0_5, %c0_6] : memref<1x512xf32, #tpu.memory_space<vmem>>, vector<1x512xf32>
    %8 = vector.broadcast %7 : vector<1x512xf32> to vector<64x512xf32>
    %9 = arith.addf %6, %8 : vector<64x512xf32>
    %10 = vector.shape_cast %9 : vector<64x512xf32> to vector<8x8x512xf32>
    %c0_7 = arith.constant 0 : index
    %c0_8 = arith.constant 0 : index
    %c0_9 = arith.constant 0 : index
    %11 = vector.load %arg9[%c0_7, %c0_8, %c0_9] : memref<8x8x512xf32, #tpu.memory_space<vmem>>, vector<8x8x512xf32>
    tpu.vector_store %arg9[%c0_7, %c0_8, %c0_9], %10 {strides = array<i32>} : memref<8x8x512xf32, #tpu.memory_space<vmem>>, vector<8x8x512xf32>,
    %c0_10 = arith.constant 0 : index
    %c0_11 = arith.constant 0 : index
    %12 = vector.load %arg10[%c0_10, %c0_11] : memref<8x128xf32, #tpu.memory_space<vmem>>, vector<8x128xf32>
    %c0_12 = arith.constant 0 : index
    %c0_13 = arith.constant 0 : index
    %13 = vector.load %arg11[%c0_12, %c0_13] : memref<8x128xf32, #tpu.memory_space<vmem>>, vector<8x128xf32>
    %c0_i32_14 = arith.constant 0 : i32
    %14 = arith.index_cast %c0_i32_14 : i32 to index
    %c0_15 = arith.constant 0 : index
    %c0_16 = arith.constant 0 : index
    %15 = vector.load %arg9[%14, %c0_15, %c0_16] : memref<8x8x512xf32, #tpu.memory_space<vmem>>, vector<1x8x512xf32>
    %16 = vector.shape_cast %15 : vector<1x8x512xf32> to vector<8x512xf32>
    %17 = arith.truncf %12 : vector<8x128xf32> to vector<8x128xbf16>
    %c0_17 = arith.constant 0 : index
    %c0_18 = arith.constant 0 : index
    %18 = vector.load %arg4[%c0_17, %c0_18] : memref<128x512xbf16, #tpu.memory_space<vmem>>, vector<128x512xbf16>
    %cst_19 = arith.constant dense<0.000000e+00> : vector<8x512xf32>
    %19 = tpu.matmul %17, %18, %cst_19 {dimension_numbers = #tpu.dot_dimension_numbers<[1], [0], [0], [1], [0, 0, 1, 1], [], []>} : vector<8x128xbf16>, vector<128x512xbf16>, vector<8x512xf32> -> vector<8x512xf32>
    %20 = arith.addf %16, %19 : vector<8x512xf32>
    %21 = vector.extract_strided_slice %20 {offsets = [0, 0], sizes = [8, 128], strides = [1, 1]} : vector<8x512xf32> to vector<8x128xf32>
    %cst_20 = arith.constant 5.000000e-01 : f32
    %22 = vector.broadcast %cst_20 : f32 to vector<8x128xf32>
    %23 = arith.mulf %22, %21 : vector<8x128xf32>
    %24 = math.tanh %23 : vector<8x128xf32>
    %cst_21 = arith.constant 1.000000e+00 : f32
    %25 = vector.broadcast %cst_21 : f32 to vector<8x128xf32>
    %26 = arith.addf %24, %25 : vector<8x128xf32>
    %cst_22 = arith.constant 5.000000e-01 : f32
    %27 = vector.broadcast %cst_22 : f32 to vector<8x128xf32>
    %28 = arith.mulf %27, %26 : vector<8x128xf32>
    %29 = vector.extract_strided_slice %20 {offsets = [0, 128], sizes = [8, 128], strides = [1, 1]} : vector<8x512xf32> to vector<8x128xf32>
    %cst_23 = arith.constant 5.000000e-01 : f32
    %30 = vector.broadcast %cst_23 : f32 to vector<8x128xf32>
    %31 = arith.mulf %30, %29 : vector<8x128xf32>
    %32 = math.tanh %31 : vector<8x128xf32>
    %cst_24 = arith.constant 1.000000e+00 : f32
    %33 = vector.broadcast %cst_24 : f32 to vector<8x128xf32>
    %34 = arith.addf %32, %33 : vector<8x128xf32>
    %cst_25 = arith.constant 5.000000e-01 : f32
    %35 = vector.broadcast %cst_25 : f32 to vector<8x128xf32>
    %36 = arith.mulf %35, %34 : vector<8x128xf32>
    %37 = vector.extract_strided_slice %20 {offsets = [0, 256], sizes = [8, 128], strides = [1, 1]} : vector<8x512xf32> to vector<8x128xf32>
    %38 = math.tanh %37 : vector<8x128xf32>
    %39 = vector.extract_strided_slice %20 {offsets = [0, 384], sizes = [8, 128], strides = [1, 1]} : vector<8x512xf32> to vector<8x128xf32>
    %cst_26 = arith.constant 5.000000e-01 : f32
    %40 = vector.broadcast %cst_26 : f32 to vector<8x128xf32>
    %41 = arith.mulf %40, %39 : vector<8x128xf32>
    %42 = math.tanh %41 : vector<8x128xf32>
    %cst_27 = arith.constant 1.000000e+00 : f32
    %43 = vector.broadcast %cst_27 : f32 to vector<8x128xf32>
    %44 = arith.addf %42, %43 : vector<8x128xf32>
    %cst_28 = arith.constant 5.000000e-01 : f32
    %45 = vector.broadcast %cst_28 : f32 to vector<8x128xf32>
    %46 = arith.mulf %45, %44 : vector<8x128xf32>
    %47 = arith.mulf %36, %13 : vector<8x128xf32>
    %48 = arith.mulf %28, %38 : vector<8x128xf32>
    %49 = arith.addf %47, %48 : vector<8x128xf32>
    %50 = math.tanh %49 : vector<8x128xf32>
    %51 = arith.mulf %46, %50 : vector<8x128xf32>
    %c1_i32 = arith.constant 1 : i32
    %52 = arith.index_cast %c1_i32 : i32 to index
    %c0_29 = arith.constant 0 : index
    %c0_30 = arith.constant 0 : index
    %53 = vector.load %arg9[%52, %c0_29, %c0_30] : memref<8x8x512xf32, #tpu.memory_space<vmem>>, vector<1x8x512xf32>
    %54 = vector.shape_cast %53 : vector<1x8x512xf32> to vector<8x512xf32>
    %55 = arith.truncf %51 : vector<8x128xf32> to vector<8x128xbf16>
    %c0_31 = arith.constant 0 : index
    %c0_32 = arith.constant 0 : index
    %56 = vector.load %arg4[%c0_31, %c0_32] : memref<128x512xbf16, #tpu.memory_space<vmem>>, vector<128x512xbf16>
    %cst_33 = arith.constant dense<0.000000e+00> : vector<8x512xf32>
    %57 = tpu.matmul %55, %56, %cst_33 {dimension_numbers = #tpu.dot_dimension_numbers<[1], [0], [0], [1], [0, 0, 1, 1], [], []>} : vector<8x128xbf16>, vector<128x512xbf16>, vector<8x512xf32> -> vector<8x512xf32>
    %58 = arith.addf %54, %57 : vector<8x512xf32>
    %59 = vector.extract_strided_slice %58 {offsets = [0, 0], sizes = [8, 128], strides = [1, 1]} : vector<8x512xf32> to vector<8x128xf32>
    %cst_34 = arith.constant 5.000000e-01 : f32
    %60 = vector.broadcast %cst_34 : f32 to vector<8x128xf32>
    %61 = arith.mulf %60, %59 : vector<8x128xf32>
    %62 = math.tanh %61 : vector<8x128xf32>
    %cst_35 = arith.constant 1.000000e+00 : f32
    %63 = vector.broadcast %cst_35 : f32 to vector<8x128xf32>
    %64 = arith.addf %62, %63 : vector<8x128xf32>
    %cst_36 = arith.constant 5.000000e-01 : f32
    %65 = vector.broadcast %cst_36 : f32 to vector<8x128xf32>
    %66 = arith.mulf %65, %64 : vector<8x128xf32>
    %67 = vector.extract_strided_slice %58 {offsets = [0, 128], sizes = [8, 128], strides = [1, 1]} : vector<8x512xf32> to vector<8x128xf32>
    %cst_37 = arith.constant 5.000000e-01 : f32
    %68 = vector.broadcast %cst_37 : f32 to vector<8x128xf32>
    %69 = arith.mulf %68, %67 : vector<8x128xf32>
    %70 = math.tanh %69 : vector<8x128xf32>
    %cst_38 = arith.constant 1.000000e+00 : f32
    %71 = vector.broadcast %cst_38 : f32 to vector<8x128xf32>
    %72 = arith.addf %70, %71 : vector<8x128xf32>
    %cst_39 = arith.constant 5.000000e-01 : f32
    %73 = vector.broadcast %cst_39 : f32 to vector<8x128xf32>
    %74 = arith.mulf %73, %72 : vector<8x128xf32>
    %75 = vector.extract_strided_slice %58 {offsets = [0, 256], sizes = [8, 128], strides = [1, 1]} : vector<8x512xf32> to vector<8x128xf32>
    %76 = math.tanh %75 : vector<8x128xf32>
    %77 = vector.extract_strided_slice %58 {offsets = [0, 384], sizes = [8, 128], strides = [1, 1]} : vector<8x512xf32> to vector<8x128xf32>
    %cst_40 = arith.constant 5.000000e-01 : f32
    %78 = vector.broadcast %cst_40 : f32 to vector<8x128xf32>
    %79 = arith.mulf %78, %77 : vector<8x128xf32>
    %80 = math.tanh %79 : vector<8x128xf32>
    %cst_41 = arith.constant 1.000000e+00 : f32
    %81 = vector.broadcast %cst_41 : f32 to vector<8x128xf32>
    %82 = arith.addf %80, %81 : vector<8x128xf32>
    %cst_42 = arith.constant 5.000000e-01 : f32
    %83 = vector.broadcast %cst_42 : f32 to vector<8x128xf32>
    %84 = arith.mulf %83, %82 : vector<8x128xf32>
    %85 = arith.mulf %74, %49 : vector<8x128xf32>
    %86 = arith.mulf %66, %76 : vector<8x128xf32>
    %87 = arith.addf %85, %86 : vector<8x128xf32>
    %88 = math.tanh %87 : vector<8x128xf32>
    %89 = arith.mulf %84, %88 : vector<8x128xf32>
    %c2_i32 = arith.constant 2 : i32
    %90 = arith.index_cast %c2_i32 : i32 to index
    %c0_43 = arith.constant 0 : index
    %c0_44 = arith.constant 0 : index
    %91 = vector.load %arg9[%90, %c0_43, %c0_44] : memref<8x8x512xf32, #tpu.memory_space<vmem>>, vector<1x8x512xf32>
    %92 = vector.shape_cast %91 : vector<1x8x512xf32> to vector<8x512xf32>
    %93 = arith.truncf %89 : vector<8x128xf32> to vector<8x128xbf16>
    %c0_45 = arith.constant 0 : index
    %c0_46 = arith.constant 0 : index
    %94 = vector.load %arg4[%c0_45, %c0_46] : memref<128x512xbf16, #tpu.memory_space<vmem>>, vector<128x512xbf16>
    %cst_47 = arith.constant dense<0.000000e+00> : vector<8x512xf32>
    %95 = tpu.matmul %93, %94, %cst_47 {dimension_numbers = #tpu.dot_dimension_numbers<[1], [0], [0], [1], [0, 0, 1, 1], [], []>} : vector<8x128xbf16>, vector<128x512xbf16>, vector<8x512xf32> -> vector<8x512xf32>
    %96 = arith.addf %92, %95 : vector<8x512xf32>
    %97 = vector.extract_strided_slice %96 {offsets = [0, 0], sizes = [8, 128], strides = [1, 1]} : vector<8x512xf32> to vector<8x128xf32>
    %cst_48 = arith.constant 5.000000e-01 : f32
    %98 = vector.broadcast %cst_48 : f32 to vector<8x128xf32>
    %99 = arith.mulf %98, %97 : vector<8x128xf32>
    %100 = math.tanh %99 : vector<8x128xf32>
    %cst_49 = arith.constant 1.000000e+00 : f32
    %101 = vector.broadcast %cst_49 : f32 to vector<8x128xf32>
    %102 = arith.addf %100, %101 : vector<8x128xf32>
    %cst_50 = arith.constant 5.000000e-01 : f32
    %103 = vector.broadcast %cst_50 : f32 to vector<8x128xf32>
    %104 = arith.mulf %103, %102 : vector<8x128xf32>
    %105 = vector.extract_strided_slice %96 {offsets = [0, 128], sizes = [8, 128], strides = [1, 1]} : vector<8x512xf32> to vector<8x128xf32>
    %cst_51 = arith.constant 5.000000e-01 : f32
    %106 = vector.broadcast %cst_51 : f32 to vector<8x128xf32>
    %107 = arith.mulf %106, %105 : vector<8x128xf32>
    %108 = math.tanh %107 : vector<8x128xf32>
    %cst_52 = arith.constant 1.000000e+00 : f32
    %109 = vector.broadcast %cst_52 : f32 to vector<8x128xf32>
    %110 = arith.addf %108, %109 : vector<8x128xf32>
    %cst_53 = arith.constant 5.000000e-01 : f32
    %111 = vector.broadcast %cst_53 : f32 to vector<8x128xf32>
    %112 = arith.mulf %111, %110 : vector<8x128xf32>
    %113 = vector.extract_strided_slice %96 {offsets = [0, 256], sizes = [8, 128], strides = [1, 1]} : vector<8x512xf32> to vector<8x128xf32>
    %114 = math.tanh %113 : vector<8x128xf32>
    %115 = vector.extract_strided_slice %96 {offsets = [0, 384], sizes = [8, 128], strides = [1, 1]} : vector<8x512xf32> to vector<8x128xf32>
    %cst_54 = arith.constant 5.000000e-01 : f32
    %116 = vector.broadcast %cst_54 : f32 to vector<8x128xf32>
    %117 = arith.mulf %116, %115 : vector<8x128xf32>
    %118 = math.tanh %117 : vector<8x128xf32>
    %cst_55 = arith.constant 1.000000e+00 : f32
    %119 = vector.broadcast %cst_55 : f32 to vector<8x128xf32>
    %120 = arith.addf %118, %119 : vector<8x128xf32>
    %cst_56 = arith.constant 5.000000e-01 : f32
    %121 = vector.broadcast %cst_56 : f32 to vector<8x128xf32>
    %122 = arith.mulf %121, %120 : vector<8x128xf32>
    %123 = arith.mulf %112, %87 : vector<8x128xf32>
    %124 = arith.mulf %104, %114 : vector<8x128xf32>
    %125 = arith.addf %123, %124 : vector<8x128xf32>
    %126 = math.tanh %125 : vector<8x128xf32>
    %127 = arith.mulf %122, %126 : vector<8x128xf32>
    %c3_i32 = arith.constant 3 : i32
    %128 = arith.index_cast %c3_i32 : i32 to index
    %c0_57 = arith.constant 0 : index
    %c0_58 = arith.constant 0 : index
    %129 = vector.load %arg9[%128, %c0_57, %c0_58] : memref<8x8x512xf32, #tpu.memory_space<vmem>>, vector<1x8x512xf32>
    %130 = vector.shape_cast %129 : vector<1x8x512xf32> to vector<8x512xf32>
    %131 = arith.truncf %127 : vector<8x128xf32> to vector<8x128xbf16>
    %c0_59 = arith.constant 0 : index
    %c0_60 = arith.constant 0 : index
    %132 = vector.load %arg4[%c0_59, %c0_60] : memref<128x512xbf16, #tpu.memory_space<vmem>>, vector<128x512xbf16>
    %cst_61 = arith.constant dense<0.000000e+00> : vector<8x512xf32>
    %133 = tpu.matmul %131, %132, %cst_61 {dimension_numbers = #tpu.dot_dimension_numbers<[1], [0], [0], [1], [0, 0, 1, 1], [], []>} : vector<8x128xbf16>, vector<128x512xbf16>, vector<8x512xf32> -> vector<8x512xf32>
    %134 = arith.addf %130, %133 : vector<8x512xf32>
    %135 = vector.extract_strided_slice %134 {offsets = [0, 0], sizes = [8, 128], strides = [1, 1]} : vector<8x512xf32> to vector<8x128xf32>
    %cst_62 = arith.constant 5.000000e-01 : f32
    %136 = vector.broadcast %cst_62 : f32 to vector<8x128xf32>
    %137 = arith.mulf %136, %135 : vector<8x128xf32>
    %138 = math.tanh %137 : vector<8x128xf32>
    %cst_63 = arith.constant 1.000000e+00 : f32
    %139 = vector.broadcast %cst_63 : f32 to vector<8x128xf32>
    %140 = arith.addf %138, %139 : vector<8x128xf32>
    %cst_64 = arith.constant 5.000000e-01 : f32
    %141 = vector.broadcast %cst_64 : f32 to vector<8x128xf32>
    %142 = arith.mulf %141, %140 : vector<8x128xf32>
    %143 = vector.extract_strided_slice %134 {offsets = [0, 128], sizes = [8, 128], strides = [1, 1]} : vector<8x512xf32> to vector<8x128xf32>
    %cst_65 = arith.constant 5.000000e-01 : f32
    %144 = vector.broadcast %cst_65 : f32 to vector<8x128xf32>
    %145 = arith.mulf %144, %143 : vector<8x128xf32>
    %146 = math.tanh %145 : vector<8x128xf32>
    %cst_66 = arith.constant 1.000000e+00 : f32
    %147 = vector.broadcast %cst_66 : f32 to vector<8x128xf32>
    %148 = arith.addf %146, %147 : vector<8x128xf32>
    %cst_67 = arith.constant 5.000000e-01 : f32
    %149 = vector.broadcast %cst_67 : f32 to vector<8x128xf32>
    %150 = arith.mulf %149, %148 : vector<8x128xf32>
    %151 = vector.extract_strided_slice %134 {offsets = [0, 256], sizes = [8, 128], strides = [1, 1]} : vector<8x512xf32> to vector<8x128xf32>
    %152 = math.tanh %151 : vector<8x128xf32>
    %153 = vector.extract_strided_slice %134 {offsets = [0, 384], sizes = [8, 128], strides = [1, 1]} : vector<8x512xf32> to vector<8x128xf32>
    %cst_68 = arith.constant 5.000000e-01 : f32
    %154 = vector.broadcast %cst_68 : f32 to vector<8x128xf32>
    %155 = arith.mulf %154, %153 : vector<8x128xf32>
    %156 = math.tanh %155 : vector<8x128xf32>
    %cst_69 = arith.constant 1.000000e+00 : f32
    %157 = vector.broadcast %cst_69 : f32 to vector<8x128xf32>
    %158 = arith.addf %156, %157 : vector<8x128xf32>
    %cst_70 = arith.constant 5.000000e-01 : f32
    %159 = vector.broadcast %cst_70 : f32 to vector<8x128xf32>
    %160 = arith.mulf %159, %158 : vector<8x128xf32>
    %161 = arith.mulf %150, %125 : vector<8x128xf32>
    %162 = arith.mulf %142, %152 : vector<8x128xf32>
    %163 = arith.addf %161, %162 : vector<8x128xf32>
    %164 = math.tanh %163 : vector<8x128xf32>
    %165 = arith.mulf %160, %164 : vector<8x128xf32>
    %c4_i32 = arith.constant 4 : i32
    %166 = arith.index_cast %c4_i32 : i32 to index
    %c0_71 = arith.constant 0 : index
    %c0_72 = arith.constant 0 : index
    %167 = vector.load %arg9[%166, %c0_71, %c0_72] : memref<8x8x512xf32, #tpu.memory_space<vmem>>, vector<1x8x512xf32>
    %168 = vector.shape_cast %167 : vector<1x8x512xf32> to vector<8x512xf32>
    %169 = arith.truncf %165 : vector<8x128xf32> to vector<8x128xbf16>
    %c0_73 = arith.constant 0 : index
    %c0_74 = arith.constant 0 : index
    %170 = vector.load %arg4[%c0_73, %c0_74] : memref<128x512xbf16, #tpu.memory_space<vmem>>, vector<128x512xbf16>
    %cst_75 = arith.constant dense<0.000000e+00> : vector<8x512xf32>
    %171 = tpu.matmul %169, %170, %cst_75 {dimension_numbers = #tpu.dot_dimension_numbers<[1], [0], [0], [1], [0, 0, 1, 1], [], []>} : vector<8x128xbf16>, vector<128x512xbf16>, vector<8x512xf32> -> vector<8x512xf32>
    %172 = arith.addf %168, %171 : vector<8x512xf32>
    %173 = vector.extract_strided_slice %172 {offsets = [0, 0], sizes = [8, 128], strides = [1, 1]} : vector<8x512xf32> to vector<8x128xf32>
    %cst_76 = arith.constant 5.000000e-01 : f32
    %174 = vector.broadcast %cst_76 : f32 to vector<8x128xf32>
    %175 = arith.mulf %174, %173 : vector<8x128xf32>
    %176 = math.tanh %175 : vector<8x128xf32>
    %cst_77 = arith.constant 1.000000e+00 : f32
    %177 = vector.broadcast %cst_77 : f32 to vector<8x128xf32>
    %178 = arith.addf %176, %177 : vector<8x128xf32>
    %cst_78 = arith.constant 5.000000e-01 : f32
    %179 = vector.broadcast %cst_78 : f32 to vector<8x128xf32>
    %180 = arith.mulf %179, %178 : vector<8x128xf32>
    %181 = vector.extract_strided_slice %172 {offsets = [0, 128], sizes = [8, 128], strides = [1, 1]} : vector<8x512xf32> to vector<8x128xf32>
    %cst_79 = arith.constant 5.000000e-01 : f32
    %182 = vector.broadcast %cst_79 : f32 to vector<8x128xf32>
    %183 = arith.mulf %182, %181 : vector<8x128xf32>
    %184 = math.tanh %183 : vector<8x128xf32>
    %cst_80 = arith.constant 1.000000e+00 : f32
    %185 = vector.broadcast %cst_80 : f32 to vector<8x128xf32>
    %186 = arith.addf %184, %185 : vector<8x128xf32>
    %cst_81 = arith.constant 5.000000e-01 : f32
    %187 = vector.broadcast %cst_81 : f32 to vector<8x128xf32>
    %188 = arith.mulf %187, %186 : vector<8x128xf32>
    %189 = vector.extract_strided_slice %172 {offsets = [0, 256], sizes = [8, 128], strides = [1, 1]} : vector<8x512xf32> to vector<8x128xf32>
    %190 = math.tanh %189 : vector<8x128xf32>
    %191 = vector.extract_strided_slice %172 {offsets = [0, 384], sizes = [8, 128], strides = [1, 1]} : vector<8x512xf32> to vector<8x128xf32>
    %cst_82 = arith.constant 5.000000e-01 : f32
    %192 = vector.broadcast %cst_82 : f32 to vector<8x128xf32>
    %193 = arith.mulf %192, %191 : vector<8x128xf32>
    %194 = math.tanh %193 : vector<8x128xf32>
    %cst_83 = arith.constant 1.000000e+00 : f32
    %195 = vector.broadcast %cst_83 : f32 to vector<8x128xf32>
    %196 = arith.addf %194, %195 : vector<8x128xf32>
    %cst_84 = arith.constant 5.000000e-01 : f32
    %197 = vector.broadcast %cst_84 : f32 to vector<8x128xf32>
    %198 = arith.mulf %197, %196 : vector<8x128xf32>
    %199 = arith.mulf %188, %163 : vector<8x128xf32>
    %200 = arith.mulf %180, %190 : vector<8x128xf32>
    %201 = arith.addf %199, %200 : vector<8x128xf32>
    %202 = math.tanh %201 : vector<8x128xf32>
    %203 = arith.mulf %198, %202 : vector<8x128xf32>
    %c5_i32 = arith.constant 5 : i32
    %204 = arith.index_cast %c5_i32 : i32 to index
    %c0_85 = arith.constant 0 : index
    %c0_86 = arith.constant 0 : index
    %205 = vector.load %arg9[%204, %c0_85, %c0_86] : memref<8x8x512xf32, #tpu.memory_space<vmem>>, vector<1x8x512xf32>
    %206 = vector.shape_cast %205 : vector<1x8x512xf32> to vector<8x512xf32>
    %207 = arith.truncf %203 : vector<8x128xf32> to vector<8x128xbf16>
    %c0_87 = arith.constant 0 : index
    %c0_88 = arith.constant 0 : index
    %208 = vector.load %arg4[%c0_87, %c0_88] : memref<128x512xbf16, #tpu.memory_space<vmem>>, vector<128x512xbf16>
    %cst_89 = arith.constant dense<0.000000e+00> : vector<8x512xf32>
    %209 = tpu.matmul %207, %208, %cst_89 {dimension_numbers = #tpu.dot_dimension_numbers<[1], [0], [0], [1], [0, 0, 1, 1], [], []>} : vector<8x128xbf16>, vector<128x512xbf16>, vector<8x512xf32> -> vector<8x512xf32>
    %210 = arith.addf %206, %209 : vector<8x512xf32>
    %211 = vector.extract_strided_slice %210 {offsets = [0, 0], sizes = [8, 128], strides = [1, 1]} : vector<8x512xf32> to vector<8x128xf32>
    %cst_90 = arith.constant 5.000000e-01 : f32
    %212 = vector.broadcast %cst_90 : f32 to vector<8x128xf32>
    %213 = arith.mulf %212, %211 : vector<8x128xf32>
    %214 = math.tanh %213 : vector<8x128xf32>
    %cst_91 = arith.constant 1.000000e+00 : f32
    %215 = vector.broadcast %cst_91 : f32 to vector<8x128xf32>
    %216 = arith.addf %214, %215 : vector<8x128xf32>
    %cst_92 = arith.constant 5.000000e-01 : f32
    %217 = vector.broadcast %cst_92 : f32 to vector<8x128xf32>
    %218 = arith.mulf %217, %216 : vector<8x128xf32>
    %219 = vector.extract_strided_slice %210 {offsets = [0, 128], sizes = [8, 128], strides = [1, 1]} : vector<8x512xf32> to vector<8x128xf32>
    %cst_93 = arith.constant 5.000000e-01 : f32
    %220 = vector.broadcast %cst_93 : f32 to vector<8x128xf32>
    %221 = arith.mulf %220, %219 : vector<8x128xf32>
    %222 = math.tanh %221 : vector<8x128xf32>
    %cst_94 = arith.constant 1.000000e+00 : f32
    %223 = vector.broadcast %cst_94 : f32 to vector<8x128xf32>
    %224 = arith.addf %222, %223 : vector<8x128xf32>
    %cst_95 = arith.constant 5.000000e-01 : f32
    %225 = vector.broadcast %cst_95 : f32 to vector<8x128xf32>
    %226 = arith.mulf %225, %224 : vector<8x128xf32>
    %227 = vector.extract_strided_slice %210 {offsets = [0, 256], sizes = [8, 128], strides = [1, 1]} : vector<8x512xf32> to vector<8x128xf32>
    %228 = math.tanh %227 : vector<8x128xf32>
    %229 = vector.extract_strided_slice %210 {offsets = [0, 384], sizes = [8, 128], strides = [1, 1]} : vector<8x512xf32> to vector<8x128xf32>
    %cst_96 = arith.constant 5.000000e-01 : f32
    %230 = vector.broadcast %cst_96 : f32 to vector<8x128xf32>
    %231 = arith.mulf %230, %229 : vector<8x128xf32>
    %232 = math.tanh %231 : vector<8x128xf32>
    %cst_97 = arith.constant 1.000000e+00 : f32
    %233 = vector.broadcast %cst_97 : f32 to vector<8x128xf32>
    %234 = arith.addf %232, %233 : vector<8x128xf32>
    %cst_98 = arith.constant 5.000000e-01 : f32
    %235 = vector.broadcast %cst_98 : f32 to vector<8x128xf32>
    %236 = arith.mulf %235, %234 : vector<8x128xf32>
    %237 = arith.mulf %226, %201 : vector<8x128xf32>
    %238 = arith.mulf %218, %228 : vector<8x128xf32>
    %239 = arith.addf %237, %238 : vector<8x128xf32>
    %240 = math.tanh %239 : vector<8x128xf32>
    %241 = arith.mulf %236, %240 : vector<8x128xf32>
    %c6_i32 = arith.constant 6 : i32
    %242 = arith.index_cast %c6_i32 : i32 to index
    %c0_99 = arith.constant 0 : index
    %c0_100 = arith.constant 0 : index
    %243 = vector.load %arg9[%242, %c0_99, %c0_100] : memref<8x8x512xf32, #tpu.memory_space<vmem>>, vector<1x8x512xf32>
    %244 = vector.shape_cast %243 : vector<1x8x512xf32> to vector<8x512xf32>
    %245 = arith.truncf %241 : vector<8x128xf32> to vector<8x128xbf16>
    %c0_101 = arith.constant 0 : index
    %c0_102 = arith.constant 0 : index
    %246 = vector.load %arg4[%c0_101, %c0_102] : memref<128x512xbf16, #tpu.memory_space<vmem>>, vector<128x512xbf16>
    %cst_103 = arith.constant dense<0.000000e+00> : vector<8x512xf32>
    %247 = tpu.matmul %245, %246, %cst_103 {dimension_numbers = #tpu.dot_dimension_numbers<[1], [0], [0], [1], [0, 0, 1, 1], [], []>} : vector<8x128xbf16>, vector<128x512xbf16>, vector<8x512xf32> -> vector<8x512xf32>
    %248 = arith.addf %244, %247 : vector<8x512xf32>
    %249 = vector.extract_strided_slice %248 {offsets = [0, 0], sizes = [8, 128], strides = [1, 1]} : vector<8x512xf32> to vector<8x128xf32>
    %cst_104 = arith.constant 5.000000e-01 : f32
    %250 = vector.broadcast %cst_104 : f32 to vector<8x128xf32>
    %251 = arith.mulf %250, %249 : vector<8x128xf32>
    %252 = math.tanh %251 : vector<8x128xf32>
    %cst_105 = arith.constant 1.000000e+00 : f32
    %253 = vector.broadcast %cst_105 : f32 to vector<8x128xf32>
    %254 = arith.addf %252, %253 : vector<8x128xf32>
    %cst_106 = arith.constant 5.000000e-01 : f32
    %255 = vector.broadcast %cst_106 : f32 to vector<8x128xf32>
    %256 = arith.mulf %255, %254 : vector<8x128xf32>
    %257 = vector.extract_strided_slice %248 {offsets = [0, 128], sizes = [8, 128], strides = [1, 1]} : vector<8x512xf32> to vector<8x128xf32>
    %cst_107 = arith.constant 5.000000e-01 : f32
    %258 = vector.broadcast %cst_107 : f32 to vector<8x128xf32>
    %259 = arith.mulf %258, %257 : vector<8x128xf32>
    %260 = math.tanh %259 : vector<8x128xf32>
    %cst_108 = arith.constant 1.000000e+00 : f32
    %261 = vector.broadcast %cst_108 : f32 to vector<8x128xf32>
    %262 = arith.addf %260, %261 : vector<8x128xf32>
    %cst_109 = arith.constant 5.000000e-01 : f32
    %263 = vector.broadcast %cst_109 : f32 to vector<8x128xf32>
    %264 = arith.mulf %263, %262 : vector<8x128xf32>
    %265 = vector.extract_strided_slice %248 {offsets = [0, 256], sizes = [8, 128], strides = [1, 1]} : vector<8x512xf32> to vector<8x128xf32>
    %266 = math.tanh %265 : vector<8x128xf32>
    %267 = vector.extract_strided_slice %248 {offsets = [0, 384], sizes = [8, 128], strides = [1, 1]} : vector<8x512xf32> to vector<8x128xf32>
    %cst_110 = arith.constant 5.000000e-01 : f32
    %268 = vector.broadcast %cst_110 : f32 to vector<8x128xf32>
    %269 = arith.mulf %268, %267 : vector<8x128xf32>
    %270 = math.tanh %269 : vector<8x128xf32>
    %cst_111 = arith.constant 1.000000e+00 : f32
    %271 = vector.broadcast %cst_111 : f32 to vector<8x128xf32>
    %272 = arith.addf %270, %271 : vector<8x128xf32>
    %cst_112 = arith.constant 5.000000e-01 : f32
    %273 = vector.broadcast %cst_112 : f32 to vector<8x128xf32>
    %274 = arith.mulf %273, %272 : vector<8x128xf32>
    %275 = arith.mulf %264, %239 : vector<8x128xf32>
    %276 = arith.mulf %256, %266 : vector<8x128xf32>
    %277 = arith.addf %275, %276 : vector<8x128xf32>
    %278 = math.tanh %277 : vector<8x128xf32>
    %279 = arith.mulf %274, %278 : vector<8x128xf32>
    %c7_i32 = arith.constant 7 : i32
    %280 = arith.index_cast %c7_i32 : i32 to index
    %c0_113 = arith.constant 0 : index
    %c0_114 = arith.constant 0 : index
    %281 = vector.load %arg9[%280, %c0_113, %c0_114] : memref<8x8x512xf32, #tpu.memory_space<vmem>>, vector<1x8x512xf32>
    %282 = vector.shape_cast %281 : vector<1x8x512xf32> to vector<8x512xf32>
    %283 = arith.truncf %279 : vector<8x128xf32> to vector<8x128xbf16>
    %c0_115 = arith.constant 0 : index
    %c0_116 = arith.constant 0 : index
    %284 = vector.load %arg4[%c0_115, %c0_116] : memref<128x512xbf16, #tpu.memory_space<vmem>>, vector<128x512xbf16>
    %cst_117 = arith.constant dense<0.000000e+00> : vector<8x512xf32>
    %285 = tpu.matmul %283, %284, %cst_117 {dimension_numbers = #tpu.dot_dimension_numbers<[1], [0], [0], [1], [0, 0, 1, 1], [], []>} : vector<8x128xbf16>, vector<128x512xbf16>, vector<8x512xf32> -> vector<8x512xf32>
    %286 = arith.addf %282, %285 : vector<8x512xf32>
    %287 = vector.extract_strided_slice %286 {offsets = [0, 0], sizes = [8, 128], strides = [1, 1]} : vector<8x512xf32> to vector<8x128xf32>
    %cst_118 = arith.constant 5.000000e-01 : f32
    %288 = vector.broadcast %cst_118 : f32 to vector<8x128xf32>
    %289 = arith.mulf %288, %287 : vector<8x128xf32>
    %290 = math.tanh %289 : vector<8x128xf32>
    %cst_119 = arith.constant 1.000000e+00 : f32
    %291 = vector.broadcast %cst_119 : f32 to vector<8x128xf32>
    %292 = arith.addf %290, %291 : vector<8x128xf32>
    %cst_120 = arith.constant 5.000000e-01 : f32
    %293 = vector.broadcast %cst_120 : f32 to vector<8x128xf32>
    %294 = arith.mulf %293, %292 : vector<8x128xf32>
    %295 = vector.extract_strided_slice %286 {offsets = [0, 128], sizes = [8, 128], strides = [1, 1]} : vector<8x512xf32> to vector<8x128xf32>
    %cst_121 = arith.constant 5.000000e-01 : f32
    %296 = vector.broadcast %cst_121 : f32 to vector<8x128xf32>
    %297 = arith.mulf %296, %295 : vector<8x128xf32>
    %298 = math.tanh %297 : vector<8x128xf32>
    %cst_122 = arith.constant 1.000000e+00 : f32
    %299 = vector.broadcast %cst_122 : f32 to vector<8x128xf32>
    %300 = arith.addf %298, %299 : vector<8x128xf32>
    %cst_123 = arith.constant 5.000000e-01 : f32
    %301 = vector.broadcast %cst_123 : f32 to vector<8x128xf32>
    %302 = arith.mulf %301, %300 : vector<8x128xf32>
    %303 = vector.extract_strided_slice %286 {offsets = [0, 256], sizes = [8, 128], strides = [1, 1]} : vector<8x512xf32> to vector<8x128xf32>
    %304 = math.tanh %303 : vector<8x128xf32>
    %305 = vector.extract_strided_slice %286 {offsets = [0, 384], sizes = [8, 128], strides = [1, 1]} : vector<8x512xf32> to vector<8x128xf32>
    %cst_124 = arith.constant 5.000000e-01 : f32
    %306 = vector.broadcast %cst_124 : f32 to vector<8x128xf32>
    %307 = arith.mulf %306, %305 : vector<8x128xf32>
    %308 = math.tanh %307 : vector<8x128xf32>
    %cst_125 = arith.constant 1.000000e+00 : f32
    %309 = vector.broadcast %cst_125 : f32 to vector<8x128xf32>
    %310 = arith.addf %308, %309 : vector<8x128xf32>
    %cst_126 = arith.constant 5.000000e-01 : f32
    %311 = vector.broadcast %cst_126 : f32 to vector<8x128xf32>
    %312 = arith.mulf %311, %310 : vector<8x128xf32>
    %313 = arith.mulf %302, %277 : vector<8x128xf32>
    %314 = arith.mulf %294, %304 : vector<8x128xf32>
    %315 = arith.addf %313, %314 : vector<8x128xf32>
    %316 = math.tanh %315 : vector<8x128xf32>
    %317 = arith.mulf %312, %316 : vector<8x128xf32>
    %c8_i32 = arith.constant 8 : i32
    %c0_127 = arith.constant 0 : index
    %c0_128 = arith.constant 0 : index
    %318 = vector.load %arg10[%c0_127, %c0_128] : memref<8x128xf32, #tpu.memory_space<vmem>>, vector<8x128xf32>
    tpu.vector_store %arg10[%c0_127, %c0_128], %317 {strides = array<i32>} : memref<8x128xf32, #tpu.memory_space<vmem>>, vector<8x128xf32>,
    %c0_129 = arith.constant 0 : index
    %c0_130 = arith.constant 0 : index
    %319 = vector.load %arg11[%c0_129, %c0_130] : memref<8x128xf32, #tpu.memory_space<vmem>>, vector<8x128xf32>
    tpu.vector_store %arg11[%c0_129, %c0_130], %315 {strides = array<i32>} : memref<8x128xf32, #tpu.memory_space<vmem>>, vector<8x128xf32>,
    %c0_i32_131 = arith.constant 0 : i32
    %320 = arith.cmpi eq, %arg1, %c0_i32_131 : i32
    %321 = arith.extui %320 : i1 to i32
    %c0_i32_132 = arith.constant 0 : i32
    %322 = arith.cmpi ne, %321, %c0_i32_132 : i32
    scf.if %322 {
      %323 = arith.truncf %317 : vector<8x128xf32> to vector<8x128xbf16>
      %c0_133 = arith.constant 0 : index
      %c0_134 = arith.constant 0 : index
      %324 = vector.load %arg6[%c0_133, %c0_134] : memref<128x128xbf16, #tpu.memory_space<vmem>>, vector<128x128xbf16>
      %cst_135 = arith.constant dense<0.000000e+00> : vector<8x128xf32>
      %325 = tpu.matmul %323, %324, %cst_135 {dimension_numbers = #tpu.dot_dimension_numbers<[1], [0], [0], [1], [0, 0, 1, 1], [], []>} : vector<8x128xbf16>, vector<128x128xbf16>, vector<8x128xf32> -> vector<8x128xf32>
      %c0_136 = arith.constant 0 : index
      %c0_137 = arith.constant 0 : index
      %326 = vector.load %arg7[%c0_136, %c0_137] : memref<1x128xf32, #tpu.memory_space<vmem>>, vector<1x128xf32>
      %327 = vector.broadcast %326 : vector<1x128xf32> to vector<8x128xf32>
      %328 = arith.addf %325, %327 : vector<8x128xf32>
      %c0_138 = arith.constant 0 : index
      %c0_139 = arith.constant 0 : index
      %329 = vector.load %arg8[%c0_138, %c0_139] : memref<8x128xf32, #tpu.memory_space<vmem>>, vector<8x128xf32>
      tpu.vector_store %arg8[%c0_138, %c0_139], %328 {strides = array<i32>} : memref<8x128xf32, #tpu.memory_space<vmem>>, vector<8x128xf32>,
    } else {
    }
    return
  }
  func.func @transform_0(%arg0: i32, %arg1: i32) -> (i32, i32, i32) {
    %c0_i32 = arith.constant 0 : i32
    %c0_i32_0 = arith.constant 0 : i32
    return %arg1, %arg0, %c0_i32 : i32, i32, i32
  }
  func.func @transform_1(%arg0: i32, %arg1: i32) -> (i32, i32) {
    %c0_i32 = arith.constant 0 : i32
    %c0_i32_0 = arith.constant 0 : i32
    %c0_i32_1 = arith.constant 0 : i32
    return %c0_i32, %c0_i32_0 : i32, i32
  }
  func.func @transform_2(%arg0: i32, %arg1: i32) -> (i32, i32) {
    %c0_i32 = arith.constant 0 : i32
    %c0_i32_0 = arith.constant 0 : i32
    %c0_i32_1 = arith.constant 0 : i32
    return %c0_i32, %c0_i32_0 : i32, i32
  }
  func.func @transform_3(%arg0: i32, %arg1: i32) -> (i32, i32) {
    %c0_i32 = arith.constant 0 : i32
    %c0_i32_0 = arith.constant 0 : i32
    %c0_i32_1 = arith.constant 0 : i32
    return %c0_i32, %c0_i32_0 : i32, i32
  }
  func.func @transform_4(%arg0: i32, %arg1: i32) -> (i32, i32) {
    %c0_i32 = arith.constant 0 : i32
    %c0_i32_0 = arith.constant 0 : i32
    %c0_i32_1 = arith.constant 0 : i32
    return %c0_i32, %c0_i32_0 : i32, i32
  }
  func.func @transform_5(%arg0: i32, %arg1: i32) -> (i32, i32) {
    %c0_i32 = arith.constant 0 : i32
    %c0_i32_0 = arith.constant 0 : i32
    %c0_i32_1 = arith.constant 0 : i32
    return %c0_i32, %c0_i32_0 : i32, i32
  }
  func.func @transform_6(%arg0: i32, %arg1: i32) -> (i32, i32) {
    %c0_i32 = arith.constant 0 : i32
    %c0_i32_0 = arith.constant 0 : i32
    return %arg0, %c0_i32 : i32, i32
  }
}

</mosaic_0001>

<llo_original>
// kernel: tpu_custom_call.1
$region0: #{tpu_custom_call.1}
  #allocation0 [shape = 'u32[]', space=smem, size = 0x4, offset = 0x4, fixed_abs, tag = 'smem constant byte address 0x4 - core index']
  #allocation1 [shape = 'u32[72,128]{1,0:T(1,128)}', space=vmem, size = 0x9000, scoped, tag = 'internal scratch']
  #allocation2 [shape = 'f32[8,8,512]{2,1,0:T(8,128)}', space=vmem, size = 0x20000, scoped, tag = 'scratch operand']
  #allocation3 [shape = 'f32[8,128]{1,0:T(8,128)}', space=vmem, size = 0x1000, scoped, tag = 'scratch operand']
  #allocation4 [shape = 'f32[8,128]{1,0:T(8,128)}', space=vmem, size = 0x1000, scoped, tag = 'scratch operand']
  %s0 = inlined_call_operand.hbm [shape: bf16[8,8,128], index: 0, kind: input, shape index: {}]
  %s1 = inlined_call_operand.hbm [shape: bf16[128,512], index: 1, kind: input, shape index: {}]
  %s2 = inlined_call_operand.hbm [shape: bf16[128,512], index: 2, kind: input, shape index: {}]
  %s3 = inlined_call_operand.hbm [shape: f32[1,512], index: 3, kind: input, shape index: {}]
  %s4 = inlined_call_operand.hbm [shape: bf16[128,128], index: 4, kind: input, shape index: {}]
  %s5 = inlined_call_operand.vmem [shape: f32[1,128], index: 5, kind: input, shape index: {}]
  %s6 = inlined_call_operand.hbm [shape: f32[8,128], index: 6, kind: output, shape index: {}]
  %s7 = sld [smem:[#allocation0]]
  $region62: #{tpu_custom_call.1} parent=0
    _
  %s9 = ssub.s32 1, %s7
  %s10 = scalar_select 0, %s9, %s7
  $region1: #{tpu_custom_call.1} parent=0
    #allocation5 [shape = 'u8[16384]{0}', space=vmem, size = 0x4000, scoped, tag = 'input window, operand 0, single buffered']
    #allocation6 [shape = 's32[1]{0}', space=sflag, size = 0x4, scoped, tag = 'scoped memory for tpu_custom_call.1']
    #allocation7 [shape = 's32[1]{0}', space=sflag, size = 0x4, scoped, tag = 'scoped memory for tpu_custom_call.1']
    #allocation8 [shape = 'u8[131072]{0}', space=vmem, size = 0x20000, scoped, tag = 'input window, operand 1, single buffered']
    #allocation9 [shape = 's32[1]{0}', space=sflag, size = 0x4, scoped, tag = 'scoped memory for tpu_custom_call.1']
    #allocation10 [shape = 'u8[131072]{0}', space=vmem, size = 0x20000, scoped, tag = 'input window, operand 2, single buffered']
    #allocation11 [shape = 'u8[2048]{0}', space=vmem, size = 0x800, scoped, tag = 'input window, operand 3, single buffered']
    #allocation12 [shape = 's32[1]{0}', space=sflag, size = 0x4, scoped, tag = 'scoped memory for tpu_custom_call.1']
    #allocation13 [shape = 'u8[32768]{0}', space=vmem, size = 0x8000, scoped, tag = 'input window, operand 4, single buffered']
    #allocation14 [shape = 'u8[4096]{0}', space=vmem, size = 0x1000, scoped, tag = 'output window, operand 0, single buffered']
    %11 = vsyncpa [#allocation6], 0
    %12 = vsyncpa [#allocation9], 0
    %13 = vsyncpa [#allocation12], 0
    %14 = vsyncpa [#allocation7], 0
    // Predicated region
    $region2: #{tpu_custom_call.1} parent=1 // pred_check
      _
    $region3: #{tpu_custom_call.1} parent=1 // pred_check_branch
      %16 = sbr.rel (0) target = $region5
    $region4: #{tpu_custom_call.1} parent=1 // pred_region
      %18 = vsyncadd [#allocation6], 0
      %s19 = sshll.u32 %s0, 4
      %s20 = int_to_ptr.hbm [resolvable:$true] %s19
      %s21 = sshll.u32 [#allocation5], 4
      %s22 = int_to_ptr.vmem [resolvable:$true] %s21
      %27 = dma.hbm_to_vmem [thread:$0]  %s20, 512, %s22, [#allocation6], 64, 64, 4
    $region5: #{tpu_custom_call.1} parent=1 // pred_fallthru
      _
    // Predicated region
    $region6: #{tpu_custom_call.1} parent=1 // pred_check
      _
    $region7: #{tpu_custom_call.1} parent=1 // pred_check_branch
      %29 = sbr.rel (0) target = $region9
    $region8: #{tpu_custom_call.1} parent=1 // pred_region
      %31 = vsyncadd [#allocation9], 0
      %s32 = sshll.u32 %s1, 4
      %s33 = int_to_ptr.hbm [resolvable:$true] %s32
      %s34 = sshll.u32 [#allocation8], 4
      %s35 = int_to_ptr.vmem [resolvable:$true] %s34
      %40 = dma.hbm_to_vmem [thread:$0]  %s33, 4096, %s35, [#allocation9], 256, 256, 16
    $region9: #{tpu_custom_call.1} parent=1 // pred_fallthru
      _
    // Predicated region
    $region10: #{tpu_custom_call.1} parent=1 // pred_check
      _
    $region11: #{tpu_custom_call.1} parent=1 // pred_check_branch
      %42 = sbr.rel (0) target = $region13
    $region12: #{tpu_custom_call.1} parent=1 // pred_region
      %44 = vsyncadd [#allocation9], 0
      %s45 = sshll.u32 %s2, 4
      %s46 = int_to_ptr.hbm [resolvable:$true] %s45
      %s47 = sshll.u32 [#allocation10], 4
      %s48 = int_to_ptr.vmem [resolvable:$true] %s47
      %53 = dma.hbm_to_vmem [thread:$0]  %s46, 4096, %s48, [#allocation9], 256, 256, 16
    $region13: #{tpu_custom_call.1} parent=1 // pred_fallthru
      _
    // Predicated region
    $region14: #{tpu_custom_call.1} parent=1 // pred_check
      _
    $region15: #{tpu_custom_call.1} parent=1 // pred_check_branch
      %55 = sbr.rel (0) target = $region17
    $region16: #{tpu_custom_call.1} parent=1 // pred_region
      %57 = vsyncadd [#allocation12], 0
      %s59 = sshll.u32 %s3, 4
      %s60 = int_to_ptr.hbm [resolvable:$true] %s59
      %s61 = sshll.u32 [#allocation11], 4
      %s62 = int_to_ptr.vmem [resolvable:$true] %s61
      %64 = dma.hbm_to_vmem [thread:$0]  %s60, 64, %s62, [#allocation12]
    $region17: #{tpu_custom_call.1} parent=1 // pred_fallthru
      _
    // Predicated region
    $region18: #{tpu_custom_call.1} parent=1 // pred_check
      _
    $region19: #{tpu_custom_call.1} parent=1 // pred_check_branch
      %66 = sbr.rel (0) target = $region21
    $region20: #{tpu_custom_call.1} parent=1 // pred_region
      %68 = vsyncadd [#allocation12], 0
      %s69 = sshll.u32 %s4, 4
      %s70 = int_to_ptr.hbm [resolvable:$true] %s69
      %s71 = sshll.u32 [#allocation13], 4
      %s72 = int_to_ptr.vmem [resolvable:$true] %s71
      %77 = dma.hbm_to_vmem [thread:$0]  %s70, 1024, %s72, [#allocation12], 64, 64, 4
    $region21: #{tpu_custom_call.1} parent=1 // pred_fallthru
      _
    // Predicated region
    $region22: #{tpu_custom_call.1} parent=1 // pred_check
      _
    $region23: #{tpu_custom_call.1} parent=1 // pred_check_branch
      %79 = sbr.rel (0) target = $region25
    $region24: #{tpu_custom_call.1} parent=1 // pred_region
      _
    $region25: #{tpu_custom_call.1} parent=1 // pred_fallthru
      _
    // Predicated region
    $region26: #{tpu_custom_call.1} parent=1 // pred_check
      _
    $region27: #{tpu_custom_call.1} parent=1 // pred_check_branch
      %81 = sbr.rel (0) target = $region29
    $region28: #{tpu_custom_call.1} parent=1 // pred_region
      %83 = dma.done [#allocation6], 512
    $region29: #{tpu_custom_call.1} parent=1 // pred_fallthru
      _
    // Predicated region
    $region30: #{tpu_custom_call.1} parent=1 // pred_check
      _
    $region31: #{tpu_custom_call.1} parent=1 // pred_check_branch
      %85 = sbr.rel (0) target = $region33
    $region32: #{tpu_custom_call.1} parent=1 // pred_region
      %87 = dma.done [#allocation9], 4096
    $region33: #{tpu_custom_call.1} parent=1 // pred_fallthru
      _
    // Predicated region
    $region34: #{tpu_custom_call.1} parent=1 // pred_check
      _
    $region35: #{tpu_custom_call.1} parent=1 // pred_check_branch
      %89 = sbr.rel (0) target = $region37
    $region36: #{tpu_custom_call.1} parent=1 // pred_region
      %91 = dma.done [#allocation9], 4096
    $region37: #{tpu_custom_call.1} parent=1 // pred_fallthru
      _
    // Predicated region
    $region38: #{tpu_custom_call.1} parent=1 // pred_check
      _
    $region39: #{tpu_custom_call.1} parent=1 // pred_check_branch
      %93 = sbr.rel (0) target = $region41
    $region40: #{tpu_custom_call.1} parent=1 // pred_region
      %95 = dma.done [#allocation12], 64
    $region41: #{tpu_custom_call.1} parent=1 // pred_fallthru
      _
    // Predicated region
    $region42: #{tpu_custom_call.1} parent=1 // pred_check
      _
    $region43: #{tpu_custom_call.1} parent=1 // pred_check_branch
      %97 = sbr.rel (0) target = $region45
    $region44: #{tpu_custom_call.1} parent=1 // pred_region
      %99 = dma.done [#allocation12], 1024
    $region45: #{tpu_custom_call.1} parent=1 // pred_fallthru
      _
    %p100 = scmp.eq.s32.totalorder 0, 0
    // Predicated region
    $region46: #{tpu_custom_call.1} parent=1 // pred_check
      %p101 = pneg %p100
    $region47: #{tpu_custom_call.1} parent=1 // pred_check_branch
      %103 = sbr.rel (%p101) target = $region49
    $region48: #{tpu_custom_call.1} parent=1 // pred_region
      %104 = vst [vmem:[#allocation3] sm:$0xff] 0.0
      %105 = vst [vmem:[#allocation4] sm:$0xff] 0.0
    $region49: #{tpu_custom_call.1} parent=1 // pred_fallthru
      _
    %v106 = vld [vmem:[#allocation5] sm:$0xf]
    %v107 = vld [vmem:[#allocation5 + $0x4] sm:$0xf]
    %v108 = vld [vmem:[#allocation5 + $0x8] sm:$0xf]
    %v109 = vld [vmem:[#allocation5 + $0xc] sm:$0xf]
    %v110 = vld [vmem:[#allocation5 + $0x10] sm:$0xf]
    %v111 = vld [vmem:[#allocation5 + $0x14] sm:$0xf]
    %v112 = vld [vmem:[#allocation5 + $0x18] sm:$0xf]
    %v113 = vld [vmem:[#allocation5 + $0x1c] sm:$0xf]
    %v114 = vld [vmem:[#allocation8] sm:$0xff]
    %v115 = vld [vmem:[#allocation8 + $0x8] sm:$0xff]
    %v116 = vld [vmem:[#allocation8 + $0x10] sm:$0xff]
    %v117 = vld [vmem:[#allocation8 + $0x18] sm:$0xff]
    %v118 = vld [vmem:[#allocation8 + $0x20] sm:$0xff]
    %v119 = vld [vmem:[#allocation8 + $0x28] sm:$0xff]
    %v120 = vld [vmem:[#allocation8 + $0x30] sm:$0xff]
    %v121 = vld [vmem:[#allocation8 + $0x38] sm:$0xff]
    %v122 = vld [vmem:[#allocation8 + $0x40] sm:$0xff]
    %v123 = vld [vmem:[#allocation8 + $0x48] sm:$0xff]
    %v124 = vld [vmem:[#allocation8 + $0x50] sm:$0xff]
    %v125 = vld [vmem:[#allocation8 + $0x58] sm:$0xff]
    %v126 = vld [vmem:[#allocation8 + $0x60] sm:$0xff]
    %v127 = vld [vmem:[#allocation8 + $0x68] sm:$0xff]
    %v128 = vld [vmem:[#allocation8 + $0x70] sm:$0xff]
    %v129 = vld [vmem:[#allocation8 + $0x78] sm:$0xff]
    %v130 = vld [vmem:[#allocation8 + $0x80] sm:$0xff]
    %v131 = vld [vmem:[#allocation8 + $0x88] sm:$0xff]
    %v132 = vld [vmem:[#allocation8 + $0x90] sm:$0xff]
    %v133 = vld [vmem:[#allocation8 + $0x98] sm:$0xff]
    %v134 = vld [vmem:[#allocation8 + $0xa0] sm:$0xff]
    %v135 = vld [vmem:[#allocation8 + $0xa8] sm:$0xff]
    %v136 = vld [vmem:[#allocation8 + $0xb0] sm:$0xff]
    %v137 = vld [vmem:[#allocation8 + $0xb8] sm:$0xff]
    %v138 = vld [vmem:[#allocation8 + $0xc0] sm:$0xff]
    %v139 = vld [vmem:[#allocation8 + $0xc8] sm:$0xff]
    %v140 = vld [vmem:[#allocation8 + $0xd0] sm:$0xff]
    %v141 = vld [vmem:[#allocation8 + $0xd8] sm:$0xff]
    %v142 = vld [vmem:[#allocation8 + $0xe0] sm:$0xff]
    %v143 = vld [vmem:[#allocation8 + $0xe8] sm:$0xff]
    %v144 = vld [vmem:[#allocation8 + $0xf0] sm:$0xff]
    %v145 = vld [vmem:[#allocation8 + $0xf8] sm:$0xff]
    %v146 = vld [vmem:[#allocation11] sm:$0xf]
    %v148 = vperm.slane %v146, 0
    %v149 = vperm.slane %v146, 1
    %v150 = vperm.slane %v146, 2
    %v151 = vperm.slane %v146, 3
    %v164 = vunpack.c.l.b16 %v106
    %v165 = vunpack.c.l.b16 %v107
    %v166 = vunpack.c.l.b16 %v108
    %v167 = vunpack.c.l.b16 %v109
    %v168 = vunpack.c.l.b16 %v110
    %v169 = vunpack.c.l.b16 %v111
    %v170 = vunpack.c.l.b16 %v112
    %v171 = vunpack.c.l.b16 %v113
    %v172 = vpack.c.b16 %v165, %v164
    %v173 = vpack.c.b16 %v167, %v166
    %v174 = vpack.c.b16 %v169, %v168
    %v175 = vpack.c.b16 %v171, %v170
    %v212 = vunpack.c.l.b16 %v114
    %v213 = vunpack.c.h.b16 %v114
    %v214 = vunpack.c.l.b16 %v115
    %v215 = vunpack.c.h.b16 %v115
    %v216 = vunpack.c.l.b16 %v116
    %v217 = vunpack.c.h.b16 %v116
    %v218 = vunpack.c.l.b16 %v117
    %v219 = vunpack.c.h.b16 %v117
    %v220 = vunpack.c.l.b16 %v118
    %v221 = vunpack.c.h.b16 %v118
    %v222 = vunpack.c.l.b16 %v119
    %v223 = vunpack.c.h.b16 %v119
    %v224 = vunpack.c.l.b16 %v120
    %v225 = vunpack.c.h.b16 %v120
    %v226 = vunpack.c.l.b16 %v121
    %v227 = vunpack.c.h.b16 %v121
    %v228 = vunpack.c.l.b16 %v122
    %v229 = vunpack.c.h.b16 %v122
    %v230 = vunpack.c.l.b16 %v123
    %v231 = vunpack.c.h.b16 %v123
    %v232 = vunpack.c.l.b16 %v124
    %v233 = vunpack.c.h.b16 %v124
    %v234 = vunpack.c.l.b16 %v125
    %v235 = vunpack.c.h.b16 %v125
    %v236 = vunpack.c.l.b16 %v126
    %v237 = vunpack.c.h.b16 %v126
    %v238 = vunpack.c.l.b16 %v127
    %v239 = vunpack.c.h.b16 %v127
    %v240 = vunpack.c.l.b16 %v128
    %v241 = vunpack.c.h.b16 %v128
    %v242 = vunpack.c.l.b16 %v129
    %v243 = vunpack.c.h.b16 %v129
    %v244 = vunpack.c.l.b16 %v130
    %v245 = vunpack.c.h.b16 %v130
    %v246 = vunpack.c.l.b16 %v131
    %v247 = vunpack.c.h.b16 %v131
    %v248 = vunpack.c.l.b16 %v132
    %v249 = vunpack.c.h.b16 %v132
    %v250 = vunpack.c.l.b16 %v133
    %v251 = vunpack.c.h.b16 %v133
    %v252 = vunpack.c.l.b16 %v134
    %v253 = vunpack.c.h.b16 %v134
    %v254 = vunpack.c.l.b16 %v135
    %v255 = vunpack.c.h.b16 %v135
    %v256 = vunpack.c.l.b16 %v136
    %v257 = vunpack.c.h.b16 %v136
    %v258 = vunpack.c.l.b16 %v137
    %v259 = vunpack.c.h.b16 %v137
    %v260 = vunpack.c.l.b16 %v138
    %v261 = vunpack.c.h.b16 %v138
    %v262 = vunpack.c.l.b16 %v139
    %v263 = vunpack.c.h.b16 %v139
    %v264 = vunpack.c.l.b16 %v140
    %v265 = vunpack.c.h.b16 %v140
    %v266 = vunpack.c.l.b16 %v141
    %v267 = vunpack.c.h.b16 %v141
    %v268 = vunpack.c.l.b16 %v142
    %v269 = vunpack.c.h.b16 %v142
    %v270 = vunpack.c.l.b16 %v143
    %v271 = vunpack.c.h.b16 %v143
    %v272 = vunpack.c.l.b16 %v144
    %v273 = vunpack.c.h.b16 %v144
    %v274 = vunpack.c.l.b16 %v145
    %v275 = vunpack.c.h.b16 %v145
    %v276 = vpack.c.b16 %v216, %v212
    %v277 = vpack.c.b16 %v217, %v213
    %v278 = vpack.c.b16 %v218, %v214
    %v279 = vpack.c.b16 %v219, %v215
    %v280 = vpack.c.b16 %v224, %v220
    %v281 = vpack.c.b16 %v225, %v221
    %v282 = vpack.c.b16 %v226, %v222
    %v283 = vpack.c.b16 %v227, %v223
    %v284 = vpack.c.b16 %v232, %v228
    %v285 = vpack.c.b16 %v233, %v229
    %v286 = vpack.c.b16 %v234, %v230
    %v287 = vpack.c.b16 %v235, %v231
    %v288 = vpack.c.b16 %v240, %v236
    %v289 = vpack.c.b16 %v241, %v237
    %v290 = vpack.c.b16 %v242, %v238
    %v291 = vpack.c.b16 %v243, %v239
    %v292 = vpack.c.b16 %v248, %v244
    %v293 = vpack.c.b16 %v249, %v245
    %v294 = vpack.c.b16 %v250, %v246
    %v295 = vpack.c.b16 %v251, %v247
    %v296 = vpack.c.b16 %v256, %v252
    %v297 = vpack.c.b16 %v257, %v253
    %v298 = vpack.c.b16 %v258, %v254
    %v299 = vpack.c.b16 %v259, %v255
    %v300 = vpack.c.b16 %v264, %v260
    %v301 = vpack.c.b16 %v265, %v261
    %v302 = vpack.c.b16 %v266, %v262
    %v303 = vpack.c.b16 %v267, %v263
    %v304 = vpack.c.b16 %v272, %v268
    %v305 = vpack.c.b16 %v273, %v269
    %v306 = vpack.c.b16 %v274, %v270
    %v307 = vpack.c.b16 %v275, %v271
    %340 = vmatpush.bf16.msra.mxu0 %v304
    %341 = vmatpush.bf16.msra.mxu0 %v300
    %342 = vmatpush.bf16.msra.mxu0 %v296
    %343 = vmatpush.bf16.msra.mxu0 %v292
    %344 = vmatpush.bf16.msra.mxu0 %v288
    %345 = vmatpush.bf16.msra.mxu0 %v284
    %346 = vmatpush.bf16.msra.mxu0 %v280
    %347 = vmatpush.bf16.msra.mxu0 %v276
    %348 = vmatmul.bf16.gmra.mxu0 %v172
    %v349 = vpop.f32.mrf.mxu0
    %v350 = vadd.f32 %v148, %v349
    %v351 = vpop.f32.mrf.mxu0
    %v352 = vadd.f32 %v148, %v351
    %353 = vmatmul.bf16.gmra.mxu0 %v173
    %v354 = vpop.f32.mrf.mxu0
    %v355 = vadd.f32 %v148, %v354
    %v356 = vpop.f32.mrf.mxu0
    %v357 = vadd.f32 %v148, %v356
    %358 = vmatmul.bf16.gmra.mxu0 %v174
    %v359 = vpop.f32.mrf.mxu0
    %v360 = vadd.f32 %v148, %v359
    %v361 = vpop.f32.mrf.mxu0
    %v362 = vadd.f32 %v148, %v361
    %363 = vmatmul.bf16.gmra.mxu0 %v175
    %v364 = vpop.f32.mrf.mxu0
    %v365 = vadd.f32 %v148, %v364
    %v366 = vpop.f32.mrf.mxu0
    %v367 = vadd.f32 %v148, %v366
    %368 = vdwg.mxu0
    %369 = vmatpush.bf16.msra.mxu0 %v305
    %370 = vmatpush.bf16.msra.mxu0 %v301
    %371 = vmatpush.bf16.msra.mxu0 %v297
    %372 = vmatpush.bf16.msra.mxu0 %v293
    %373 = vmatpush.bf16.msra.mxu0 %v289
    %374 = vmatpush.bf16.msra.mxu0 %v285
    %375 = vmatpush.bf16.msra.mxu0 %v281
    %376 = vmatpush.bf16.msra.mxu0 %v277
    %377 = vmatmul.bf16.gmra.mxu0 %v172
    %v378 = vpop.f32.mrf.mxu0
    %v379 = vadd.f32 %v149, %v378
    %v380 = vpop.f32.mrf.mxu0
    %v381 = vadd.f32 %v149, %v380
    %382 = vmatmul.bf16.gmra.mxu0 %v173
    %v383 = vpop.f32.mrf.mxu0
    %v384 = vadd.f32 %v149, %v383
    %v385 = vpop.f32.mrf.mxu0
    %v386 = vadd.f32 %v149, %v385
    %387 = vmatmul.bf16.gmra.mxu0 %v174
    %v388 = vpop.f32.mrf.mxu0
    %v389 = vadd.f32 %v149, %v388
    %v390 = vpop.f32.mrf.mxu0
    %v391 = vadd.f32 %v149, %v390
    %392 = vmatmul.bf16.gmra.mxu0 %v175
    %v393 = vpop.f32.mrf.mxu0
    %v394 = vadd.f32 %v149, %v393
    %v395 = vpop.f32.mrf.mxu0
    %v396 = vadd.f32 %v149, %v395
    %397 = vdwg.mxu0
    %398 = vmatpush.bf16.msra.mxu0 %v306
    %399 = vmatpush.bf16.msra.mxu0 %v302
    %400 = vmatpush.bf16.msra.mxu0 %v298
    %401 = vmatpush.bf16.msra.mxu0 %v294
    %402 = vmatpush.bf16.msra.mxu0 %v290
    %403 = vmatpush.bf16.msra.mxu0 %v286
    %404 = vmatpush.bf16.msra.mxu0 %v282
    %405 = vmatpush.bf16.msra.mxu0 %v278
    %406 = vmatmul.bf16.gmra.mxu0 %v172
    %v407 = vpop.f32.mrf.mxu0
    %v408 = vadd.f32 %v150, %v407
    %v409 = vpop.f32.mrf.mxu0
    %v410 = vadd.f32 %v150, %v409
    %411 = vmatmul.bf16.gmra.mxu0 %v173
    %v412 = vpop.f32.mrf.mxu0
    %v413 = vadd.f32 %v150, %v412
    %v414 = vpop.f32.mrf.mxu0
    %v415 = vadd.f32 %v150, %v414
    %416 = vmatmul.bf16.gmra.mxu0 %v174
    %v417 = vpop.f32.mrf.mxu0
    %v418 = vadd.f32 %v150, %v417
    %v419 = vpop.f32.mrf.mxu0
    %v420 = vadd.f32 %v150, %v419
    %421 = vmatmul.bf16.gmra.mxu0 %v175
    %v422 = vpop.f32.mrf.mxu0
    %v423 = vadd.f32 %v150, %v422
    %v424 = vpop.f32.mrf.mxu0
    %v425 = vadd.f32 %v150, %v424
    %426 = vdwg.mxu0
    %427 = vmatpush.bf16.msra.mxu0 %v307
    %428 = vmatpush.bf16.msra.mxu0 %v303
    %429 = vmatpush.bf16.msra.mxu0 %v299
    %430 = vmatpush.bf16.msra.mxu0 %v295
    %431 = vmatpush.bf16.msra.mxu0 %v291
    %432 = vmatpush.bf16.msra.mxu0 %v287
    %433 = vmatpush.bf16.msra.mxu0 %v283
    %434 = vmatpush.bf16.msra.mxu0 %v279
    %435 = vmatmul.bf16.gmra.mxu0 %v172
    %v436 = vpop.f32.mrf.mxu0
    %v437 = vadd.f32 %v151, %v436
    %v438 = vpop.f32.mrf.mxu0
    %v439 = vadd.f32 %v151, %v438
    %440 = vmatmul.bf16.gmra.mxu0 %v173
    %v441 = vpop.f32.mrf.mxu0
    %v442 = vadd.f32 %v151, %v441
    %v443 = vpop.f32.mrf.mxu0
    %v444 = vadd.f32 %v151, %v443
    %445 = vmatmul.bf16.gmra.mxu0 %v174
    %v446 = vpop.f32.mrf.mxu0
    %v447 = vadd.f32 %v151, %v446
    %v448 = vpop.f32.mrf.mxu0
    %v449 = vadd.f32 %v151, %v448
    %450 = vmatmul.bf16.gmra.mxu0 %v175
    %v451 = vpop.f32.mrf.mxu0
    %v452 = vadd.f32 %v151, %v451
    %v453 = vpop.f32.mrf.mxu0
    %v454 = vadd.f32 %v151, %v453
    %455 = vdwg.mxu0
    %456 = vst [vmem:[#allocation2] sm:$0xff] %v350
    %457 = vst [vmem:[#allocation2 + $0x8] sm:$0xff] %v379
    %458 = vst [vmem:[#allocation2 + $0x10] sm:$0xff] %v408
    %459 = vst [vmem:[#allocation2 + $0x18] sm:$0xff] %v437
    %460 = vst [vmem:[#allocation2 + $0x20] sm:$0xff] %v352
    %461 = vst [vmem:[#allocation2 + $0x28] sm:$0xff] %v381
    %462 = vst [vmem:[#allocation2 + $0x30] sm:$0xff] %v410
    %463 = vst [vmem:[#allocation2 + $0x38] sm:$0xff] %v439
    %464 = vst [vmem:[#allocation2 + $0x40] sm:$0xff] %v355
    %465 = vst [vmem:[#allocation2 + $0x48] sm:$0xff] %v384
    %466 = vst [vmem:[#allocation2 + $0x50] sm:$0xff] %v413
    %467 = vst [vmem:[#allocation2 + $0x58] sm:$0xff] %v442
    %468 = vst [vmem:[#allocation2 + $0x60] sm:$0xff] %v357
    %469 = vst [vmem:[#allocation2 + $0x68] sm:$0xff] %v386
    %470 = vst [vmem:[#allocation2 + $0x70] sm:$0xff] %v415
    %471 = vst [vmem:[#allocation2 + $0x78] sm:$0xff] %v444
    %472 = vst [vmem:[#allocation2 + $0x80] sm:$0xff] %v360
    %473 = vst [vmem:[#allocation2 + $0x88] sm:$0xff] %v389
    %474 = vst [vmem:[#allocation2 + $0x90] sm:$0xff] %v418
    %475 = vst [vmem:[#allocation2 + $0x98] sm:$0xff] %v447
    %476 = vst [vmem:[#allocation2 + $0xa0] sm:$0xff] %v362
    %477 = vst [vmem:[#allocation2 + $0xa8] sm:$0xff] %v391
    %478 = vst [vmem:[#allocation2 + $0xb0] sm:$0xff] %v420
    %479 = vst [vmem:[#allocation2 + $0xb8] sm:$0xff] %v449
    %480 = vst [vmem:[#allocation2 + $0xc0] sm:$0xff] %v365
    %481 = vst [vmem:[#allocation2 + $0xc8] sm:$0xff] %v394
    %482 = vst [vmem:[#allocation2 + $0xd0] sm:$0xff] %v423
    %483 = vst [vmem:[#allocation2 + $0xd8] sm:$0xff] %v452
    %484 = vst [vmem:[#allocation2 + $0xe0] sm:$0xff] %v367
    %485 = vst [vmem:[#allocation2 + $0xe8] sm:$0xff] %v396
    %486 = vst [vmem:[#allocation2 + $0xf0] sm:$0xff] %v425
    %487 = vst [vmem:[#allocation2 + $0xf8] sm:$0xff] %v454
    %v488 = vld [vmem:[#allocation3] sm:$0xff]
    %v489 = vld [vmem:[#allocation4] sm:$0xff]
    %v490 = vld [vmem:[#allocation2] sm:$0xff]
    %v491 = vld [vmem:[#allocation2 + $0x8] sm:$0xff]
    %v492 = vld [vmem:[#allocation2 + $0x10] sm:$0xff]
    %v493 = vld [vmem:[#allocation2 + $0x18] sm:$0xff]
    %v494 = vpack.c.bf16 %v488, %v488
    %v495 = vld [vmem:[#allocation10] sm:$0xff]
    %v496 = vld [vmem:[#allocation10 + $0x8] sm:$0xff]
    %v497 = vld [vmem:[#allocation10 + $0x10] sm:$0xff]
    %v498 = vld [vmem:[#allocation10 + $0x18] sm:$0xff]
    %v499 = vld [vmem:[#allocation10 + $0x20] sm:$0xff]
    %v500 = vld [vmem:[#allocation10 + $0x28] sm:$0xff]
    %v501 = vld [vmem:[#allocation10 + $0x30] sm:$0xff]
    %v502 = vld [vmem:[#allocation10 + $0x38] sm:$0xff]
    %v503 = vld [vmem:[#allocation10 + $0x40] sm:$0xff]
    %v504 = vld [vmem:[#allocation10 + $0x48] sm:$0xff]
    %v505 = vld [vmem:[#allocation10 + $0x50] sm:$0xff]
    %v506 = vld [vmem:[#allocation10 + $0x58] sm:$0xff]
    %v507 = vld [vmem:[#allocation10 + $0x60] sm:$0xff]
    %v508 = vld [vmem:[#allocation10 + $0x68] sm:$0xff]
    %v509 = vld [vmem:[#allocation10 + $0x70] sm:$0xff]
    %v510 = vld [vmem:[#allocation10 + $0x78] sm:$0xff]
    %v511 = vld [vmem:[#allocation10 + $0x80] sm:$0xff]
    %v512 = vld [vmem:[#allocation10 + $0x88] sm:$0xff]
    %v513 = vld [vmem:[#allocation10 + $0x90] sm:$0xff]
    %v514 = vld [vmem:[#allocation10 + $0x98] sm:$0xff]
    %v515 = vld [vmem:[#allocation10 + $0xa0] sm:$0xff]
    %v516 = vld [vmem:[#allocation10 + $0xa8] sm:$0xff]
    %v517 = vld [vmem:[#allocation10 + $0xb0] sm:$0xff]
    %v518 = vld [vmem:[#allocation10 + $0xb8] sm:$0xff]
    %v519 = vld [vmem:[#allocation10 + $0xc0] sm:$0xff]
    %v520 = vld [vmem:[#allocation10 + $0xc8] sm:$0xff]
    %v521 = vld [vmem:[#allocation10 + $0xd0] sm:$0xff]
    %v522 = vld [vmem:[#allocation10 + $0xd8] sm:$0xff]
    %v523 = vld [vmem:[#allocation10 + $0xe0] sm:$0xff]
    %v524 = vld [vmem:[#allocation10 + $0xe8] sm:$0xff]
    %v525 = vld [vmem:[#allocation10 + $0xf0] sm:$0xff]
    %v526 = vld [vmem:[#allocation10 + $0xf8] sm:$0xff]
    %v559 = vunpack.c.l.b16 %v495
    %v560 = vunpack.c.h.b16 %v495
    %v561 = vunpack.c.l.b16 %v496
    %v562 = vunpack.c.h.b16 %v496
    %v563 = vunpack.c.l.b16 %v497
    %v564 = vunpack.c.h.b16 %v497
    %v565 = vunpack.c.l.b16 %v498
    %v566 = vunpack.c.h.b16 %v498
    %v567 = vunpack.c.l.b16 %v499
    %v568 = vunpack.c.h.b16 %v499
    %v569 = vunpack.c.l.b16 %v500
    %v570 = vunpack.c.h.b16 %v500
    %v571 = vunpack.c.l.b16 %v501
    %v572 = vunpack.c.h.b16 %v501
    %v573 = vunpack.c.l.b16 %v502
    %v574 = vunpack.c.h.b16 %v502
    %v575 = vunpack.c.l.b16 %v503
    %v576 = vunpack.c.h.b16 %v503
    %v577 = vunpack.c.l.b16 %v504
    %v578 = vunpack.c.h.b16 %v504
    %v579 = vunpack.c.l.b16 %v505
    %v580 = vunpack.c.h.b16 %v505
    %v581 = vunpack.c.l.b16 %v506
    %v582 = vunpack.c.h.b16 %v506
    %v583 = vunpack.c.l.b16 %v507
    %v584 = vunpack.c.h.b16 %v507
    %v585 = vunpack.c.l.b16 %v508
    %v586 = vunpack.c.h.b16 %v508
    %v587 = vunpack.c.l.b16 %v509
    %v588 = vunpack.c.h.b16 %v509
    %v589 = vunpack.c.l.b16 %v510
    %v590 = vunpack.c.h.b16 %v510
    %v591 = vunpack.c.l.b16 %v511
    %v592 = vunpack.c.h.b16 %v511
    %v593 = vunpack.c.l.b16 %v512
    %v594 = vunpack.c.h.b16 %v512
    %v595 = vunpack.c.l.b16 %v513
    %v596 = vunpack.c.h.b16 %v513
    %v597 = vunpack.c.l.b16 %v514
    %v598 = vunpack.c.h.b16 %v514
    %v599 = vunpack.c.l.b16 %v515
    %v600 = vunpack.c.h.b16 %v515
    %v601 = vunpack.c.l.b16 %v516
    %v602 = vunpack.c.h.b16 %v516
    %v603 = vunpack.c.l.b16 %v517
    %v604 = vunpack.c.h.b16 %v517
    %v605 = vunpack.c.l.b16 %v518
    %v606 = vunpack.c.h.b16 %v518
    %v607 = vunpack.c.l.b16 %v519
    %v608 = vunpack.c.h.b16 %v519
    %v609 = vunpack.c.l.b16 %v520
    %v610 = vunpack.c.h.b16 %v520
    %v611 = vunpack.c.l.b16 %v521
    %v612 = vunpack.c.h.b16 %v521
    %v613 = vunpack.c.l.b16 %v522
    %v614 = vunpack.c.h.b16 %v522
    %v615 = vunpack.c.l.b16 %v523
    %v616 = vunpack.c.h.b16 %v523
    %v617 = vunpack.c.l.b16 %v524
    %v618 = vunpack.c.h.b16 %v524
    %v619 = vunpack.c.l.b16 %v525
    %v620 = vunpack.c.h.b16 %v525
    %v621 = vunpack.c.l.b16 %v526
    %v622 = vunpack.c.h.b16 %v526
    %v623 = vpack.c.b16 %v563, %v559
    %v624 = vpack.c.b16 %v564, %v560
    %v625 = vpack.c.b16 %v565, %v561
    %v626 = vpack.c.b16 %v566, %v562
    %v627 = vpack.c.b16 %v571, %v567
    %v628 = vpack.c.b16 %v572, %v568
    %v629 = vpack.c.b16 %v573, %v569
    %v630 = vpack.c.b16 %v574, %v570
    %v631 = vpack.c.b16 %v579, %v575
    %v632 = vpack.c.b16 %v580, %v576
    %v633 = vpack.c.b16 %v581, %v577
    %v634 = vpack.c.b16 %v582, %v578
    %v635 = vpack.c.b16 %v587, %v583
    %v636 = vpack.c.b16 %v588, %v584
    %v637 = vpack.c.b16 %v589, %v585
    %v638 = vpack.c.b16 %v590, %v586
    %v639 = vpack.c.b16 %v595, %v591
    %v640 = vpack.c.b16 %v596, %v592
    %v641 = vpack.c.b16 %v597, %v593
    %v642 = vpack.c.b16 %v598, %v594
    %v643 = vpack.c.b16 %v603, %v599
    %v644 = vpack.c.b16 %v604, %v600
    %v645 = vpack.c.b16 %v605, %v601
    %v646 = vpack.c.b16 %v606, %v602
    %v647 = vpack.c.b16 %v611, %v607
    %v648 = vpack.c.b16 %v612, %v608
    %v649 = vpack.c.b16 %v613, %v609
    %v650 = vpack.c.b16 %v614, %v610
    %v651 = vpack.c.b16 %v619, %v615
    %v652 = vpack.c.b16 %v620, %v616
    %v653 = vpack.c.b16 %v621, %v617
    %v654 = vpack.c.b16 %v622, %v618
    %687 = vmatpush.bf16.msra.mxu0 %v651
    %688 = vmatpush.bf16.msra.mxu0 %v647
    %689 = vmatpush.bf16.msra.mxu0 %v643
    %690 = vmatpush.bf16.msra.mxu0 %v639
    %691 = vmatpush.bf16.msra.mxu0 %v635
    %692 = vmatpush.bf16.msra.mxu0 %v631
    %693 = vmatpush.bf16.msra.mxu0 %v627
    %694 = vmatpush.bf16.msra.mxu0 %v623
    %695 = vmatmul.bf16.gmra.mxu0 %v494
    %v696 = vpop.f32.mrf.mxu0
    %v697 = vadd.f32 0.0, %v696
    %v698 = vpop.f32.mrf.mxu0
    %699 = vdwg.mxu0
    %700 = vmatpush.bf16.msra.mxu0 %v652
    %701 = vmatpush.bf16.msra.mxu0 %v648
    %702 = vmatpush.bf16.msra.mxu0 %v644
    %703 = vmatpush.bf16.msra.mxu0 %v640
    %704 = vmatpush.bf16.msra.mxu0 %v636
    %705 = vmatpush.bf16.msra.mxu0 %v632
    %706 = vmatpush.bf16.msra.mxu0 %v628
    %707 = vmatpush.bf16.msra.mxu0 %v624
    %708 = vmatmul.bf16.gmra.mxu0 %v494
    %v709 = vpop.f32.mrf.mxu0
    %v710 = vadd.f32 0.0, %v709
    %v711 = vpop.f32.mrf.mxu0
    %712 = vdwg.mxu0
    %713 = vmatpush.bf16.msra.mxu0 %v653
    %714 = vmatpush.bf16.msra.mxu0 %v649
    %715 = vmatpush.bf16.msra.mxu0 %v645
    %716 = vmatpush.bf16.msra.mxu0 %v641
    %717 = vmatpush.bf16.msra.mxu0 %v637
    %718 = vmatpush.bf16.msra.mxu0 %v633
    %719 = vmatpush.bf16.msra.mxu0 %v629
    %720 = vmatpush.bf16.msra.mxu0 %v625
    %721 = vmatmul.bf16.gmra.mxu0 %v494
    %v722 = vpop.f32.mrf.mxu0
    %v723 = vadd.f32 0.0, %v722
    %v724 = vpop.f32.mrf.mxu0
    %725 = vdwg.mxu0
    %726 = vmatpush.bf16.msra.mxu0 %v654
    %727 = vmatpush.bf16.msra.mxu0 %v650
    %728 = vmatpush.bf16.msra.mxu0 %v646
    %729 = vmatpush.bf16.msra.mxu0 %v642
    %730 = vmatpush.bf16.msra.mxu0 %v638
    %731 = vmatpush.bf16.msra.mxu0 %v634
    %732 = vmatpush.bf16.msra.mxu0 %v630
    %733 = vmatpush.bf16.msra.mxu0 %v626
    %734 = vmatmul.bf16.gmra.mxu0 %v494
    %v735 = vpop.f32.mrf.mxu0
    %v736 = vadd.f32 0.0, %v735
    %v737 = vpop.f32.mrf.mxu0
    %738 = vdwg.mxu0
    %v739 = vadd.f32 %v490, %v697
    %v740 = vadd.f32 %v491, %v710
    %v741 = vadd.f32 %v492, %v723
    %v742 = vadd.f32 %v493, %v736
    %v743 = vmul.f32 %v739, 0.5
    %v744 = vtanh.pop %v743
    %v745 = vadd.f32 %v744, 1.0
    %v746 = vmul.f32 %v745, 0.5
    %v747 = vmul.f32 %v740, 0.5
    %v748 = vtanh.pop %v747
    %v749 = vadd.f32 %v748, 1.0
    %v750 = vmul.f32 %v749, 0.5
    %v751 = vtanh.pop %v741
    %v752 = vmul.f32 %v742, 0.5
    %v753 = vtanh.pop %v752
    %v754 = vadd.f32 %v753, 1.0
    %v755 = vmul.f32 %v754, 0.5
    %v756 = vmul.f32 %v750, %v489
    %v757 = vmul.f32 %v746, %v751
    %v758 = vadd.f32 %v756, %v757
    %v759 = vtanh.pop %v758
    %v760 = vmul.f32 %v755, %v759
    %s761 = scalar_lea.vmem [#allocation2], 32
    %v762 = vld [vmem:[%s761] sm:$0xff]
    %v763 = vld [vmem:[%s761 + $0x8] sm:$0xff]
    %v764 = vld [vmem:[%s761 + $0x10] sm:$0xff]
    %v765 = vld [vmem:[%s761 + $0x18] sm:$0xff]
    %v766 = vpack.c.bf16 %v760, %v760
    %767 = vmatpush.bf16.msra.mxu0 %v651
    %768 = vmatpush.bf16.msra.mxu0 %v647
    %769 = vmatpush.bf16.msra.mxu0 %v643
    %770 = vmatpush.bf16.msra.mxu0 %v639
    %771 = vmatpush.bf16.msra.mxu0 %v635
    %772 = vmatpush.bf16.msra.mxu0 %v631
    %773 = vmatpush.bf16.msra.mxu0 %v627
    %774 = vmatpush.bf16.msra.mxu0 %v623
    %775 = vmatmul.bf16.gmra.mxu0 %v766
    %v776 = vpop.f32.mrf.mxu0
    %v777 = vadd.f32 0.0, %v776
    %v778 = vpop.f32.mrf.mxu0
    %779 = vdwg.mxu0
    %780 = vmatpush.bf16.msra.mxu0 %v652
    %781 = vmatpush.bf16.msra.mxu0 %v648
    %782 = vmatpush.bf16.msra.mxu0 %v644
    %783 = vmatpush.bf16.msra.mxu0 %v640
    %784 = vmatpush.bf16.msra.mxu0 %v636
    %785 = vmatpush.bf16.msra.mxu0 %v632
    %786 = vmatpush.bf16.msra.mxu0 %v628
    %787 = vmatpush.bf16.msra.mxu0 %v624
    %788 = vmatmul.bf16.gmra.mxu0 %v766
    %v789 = vpop.f32.mrf.mxu0
    %v790 = vadd.f32 0.0, %v789
    %v791 = vpop.f32.mrf.mxu0
    %792 = vdwg.mxu0
    %793 = vmatpush.bf16.msra.mxu0 %v653
    %794 = vmatpush.bf16.msra.mxu0 %v649
    %795 = vmatpush.bf16.msra.mxu0 %v645
    %796 = vmatpush.bf16.msra.mxu0 %v641
    %797 = vmatpush.bf16.msra.mxu0 %v637
    %798 = vmatpush.bf16.msra.mxu0 %v633
    %799 = vmatpush.bf16.msra.mxu0 %v629
    %800 = vmatpush.bf16.msra.mxu0 %v625
    %801 = vmatmul.bf16.gmra.mxu0 %v766
    %v802 = vpop.f32.mrf.mxu0
    %v803 = vadd.f32 0.0, %v802
    %v804 = vpop.f32.mrf.mxu0
    %805 = vdwg.mxu0
    %806 = vmatpush.bf16.msra.mxu0 %v654
    %807 = vmatpush.bf16.msra.mxu0 %v650
    %808 = vmatpush.bf16.msra.mxu0 %v646
    %809 = vmatpush.bf16.msra.mxu0 %v642
    %810 = vmatpush.bf16.msra.mxu0 %v638
    %811 = vmatpush.bf16.msra.mxu0 %v634
    %812 = vmatpush.bf16.msra.mxu0 %v630
    %813 = vmatpush.bf16.msra.mxu0 %v626
    %814 = vmatmul.bf16.gmra.mxu0 %v766
    %v815 = vpop.f32.mrf.mxu0
    %v816 = vadd.f32 0.0, %v815
    %v817 = vpop.f32.mrf.mxu0
    %818 = vdwg.mxu0
    %v819 = vadd.f32 %v762, %v777
    %v820 = vadd.f32 %v763, %v790
    %v821 = vadd.f32 %v764, %v803
    %v822 = vadd.f32 %v765, %v816
    %v823 = vmul.f32 %v819, 0.5
    %v824 = vtanh.pop %v823
    %v825 = vadd.f32 %v824, 1.0
    %v826 = vmul.f32 %v825, 0.5
    %v827 = vmul.f32 %v820, 0.5
    %v828 = vtanh.pop %v827
    %v829 = vadd.f32 %v828, 1.0
    %v830 = vmul.f32 %v829, 0.5
    %v831 = vtanh.pop %v821
    %v832 = vmul.f32 %v822, 0.5
    %v833 = vtanh.pop %v832
    %v834 = vadd.f32 %v833, 1.0
    %v835 = vmul.f32 %v834, 0.5
    %v836 = vmul.f32 %v830, %v758
    %v837 = vmul.f32 %v826, %v831
    %v838 = vadd.f32 %v836, %v837
    %v839 = vtanh.pop %v838
    %v840 = vmul.f32 %v835, %v839
    %s841 = scalar_lea.vmem [#allocation2], 64
    %v842 = vld [vmem:[%s841] sm:$0xff]
    %v843 = vld [vmem:[%s841 + $0x8] sm:$0xff]
    %v844 = vld [vmem:[%s841 + $0x10] sm:$0xff]
    %v845 = vld [vmem:[%s841 + $0x18] sm:$0xff]
    %v846 = vpack.c.bf16 %v840, %v840
    %847 = vmatpush.bf16.msra.mxu0 %v651
    %848 = vmatpush.bf16.msra.mxu0 %v647
    %849 = vmatpush.bf16.msra.mxu0 %v643
    %850 = vmatpush.bf16.msra.mxu0 %v639
    %851 = vmatpush.bf16.msra.mxu0 %v635
    %852 = vmatpush.bf16.msra.mxu0 %v631
    %853 = vmatpush.bf16.msra.mxu0 %v627
    %854 = vmatpush.bf16.msra.mxu0 %v623
    %855 = vmatmul.bf16.gmra.mxu0 %v846
    %v856 = vpop.f32.mrf.mxu0
    %v857 = vadd.f32 0.0, %v856
    %v858 = vpop.f32.mrf.mxu0
    %859 = vdwg.mxu0
    %860 = vmatpush.bf16.msra.mxu0 %v652
    %861 = vmatpush.bf16.msra.mxu0 %v648
    %862 = vmatpush.bf16.msra.mxu0 %v644
    %863 = vmatpush.bf16.msra.mxu0 %v640
    %864 = vmatpush.bf16.msra.mxu0 %v636
    %865 = vmatpush.bf16.msra.mxu0 %v632
    %866 = vmatpush.bf16.msra.mxu0 %v628
    %867 = vmatpush.bf16.msra.mxu0 %v624
    %868 = vmatmul.bf16.gmra.mxu0 %v846
    %v869 = vpop.f32.mrf.mxu0
    %v870 = vadd.f32 0.0, %v869
    %v871 = vpop.f32.mrf.mxu0
    %872 = vdwg.mxu0
    %873 = vmatpush.bf16.msra.mxu0 %v653
    %874 = vmatpush.bf16.msra.mxu0 %v649
    %875 = vmatpush.bf16.msra.mxu0 %v645
    %876 = vmatpush.bf16.msra.mxu0 %v641
    %877 = vmatpush.bf16.msra.mxu0 %v637
    %878 = vmatpush.bf16.msra.mxu0 %v633
    %879 = vmatpush.bf16.msra.mxu0 %v629
    %880 = vmatpush.bf16.msra.mxu0 %v625
    %881 = vmatmul.bf16.gmra.mxu0 %v846
    %v882 = vpop.f32.mrf.mxu0
    %v883 = vadd.f32 0.0, %v882
    %v884 = vpop.f32.mrf.mxu0
    %885 = vdwg.mxu0
    %886 = vmatpush.bf16.msra.mxu0 %v654
    %887 = vmatpush.bf16.msra.mxu0 %v650
    %888 = vmatpush.bf16.msra.mxu0 %v646
    %889 = vmatpush.bf16.msra.mxu0 %v642
    %890 = vmatpush.bf16.msra.mxu0 %v638
    %891 = vmatpush.bf16.msra.mxu0 %v634
    %892 = vmatpush.bf16.msra.mxu0 %v630
    %893 = vmatpush.bf16.msra.mxu0 %v626
    %894 = vmatmul.bf16.gmra.mxu0 %v846
    %v895 = vpop.f32.mrf.mxu0
    %v896 = vadd.f32 0.0, %v895
    %v897 = vpop.f32.mrf.mxu0
    %898 = vdwg.mxu0
    %v899 = vadd.f32 %v842, %v857
    %v900 = vadd.f32 %v843, %v870
    %v901 = vadd.f32 %v844, %v883
    %v902 = vadd.f32 %v845, %v896
    %v903 = vmul.f32 %v899, 0.5
    %v904 = vtanh.pop %v903
    %v905 = vadd.f32 %v904, 1.0
    %v906 = vmul.f32 %v905, 0.5
    %v907 = vmul.f32 %v900, 0.5
    %v908 = vtanh.pop %v907
    %v909 = vadd.f32 %v908, 1.0
    %v910 = vmul.f32 %v909, 0.5
    %v911 = vtanh.pop %v901
    %v912 = vmul.f32 %v902, 0.5
    %v913 = vtanh.pop %v912
    %v914 = vadd.f32 %v913, 1.0
    %v915 = vmul.f32 %v914, 0.5
    %v916 = vmul.f32 %v910, %v838
    %v917 = vmul.f32 %v906, %v911
    %v918 = vadd.f32 %v916, %v917
    %v919 = vtanh.pop %v918
    %v920 = vmul.f32 %v915, %v919
    %s921 = scalar_lea.vmem [#allocation2], 96
    %v922 = vld [vmem:[%s921] sm:$0xff]
    %v923 = vld [vmem:[%s921 + $0x8] sm:$0xff]
    %v924 = vld [vmem:[%s921 + $0x10] sm:$0xff]
    %v925 = vld [vmem:[%s921 + $0x18] sm:$0xff]
    %v926 = vpack.c.bf16 %v920, %v920
    %927 = vmatpush.bf16.msra.mxu0 %v651
    %928 = vmatpush.bf16.msra.mxu0 %v647
    %929 = vmatpush.bf16.msra.mxu0 %v643
    %930 = vmatpush.bf16.msra.mxu0 %v639
    %931 = vmatpush.bf16.msra.mxu0 %v635
    %932 = vmatpush.bf16.msra.mxu0 %v631
    %933 = vmatpush.bf16.msra.mxu0 %v627
    %934 = vmatpush.bf16.msra.mxu0 %v623
    %935 = vmatmul.bf16.gmra.mxu0 %v926
    %v936 = vpop.f32.mrf.mxu0
    %v937 = vadd.f32 0.0, %v936
    %v938 = vpop.f32.mrf.mxu0
    %939 = vdwg.mxu0
    %940 = vmatpush.bf16.msra.mxu0 %v652
    %941 = vmatpush.bf16.msra.mxu0 %v648
    %942 = vmatpush.bf16.msra.mxu0 %v644
    %943 = vmatpush.bf16.msra.mxu0 %v640
    %944 = vmatpush.bf16.msra.mxu0 %v636
    %945 = vmatpush.bf16.msra.mxu0 %v632
    %946 = vmatpush.bf16.msra.mxu0 %v628
    %947 = vmatpush.bf16.msra.mxu0 %v624
    %948 = vmatmul.bf16.gmra.mxu0 %v926
    %v949 = vpop.f32.mrf.mxu0
    %v950 = vadd.f32 0.0, %v949
    %v951 = vpop.f32.mrf.mxu0
    %952 = vdwg.mxu0
    %953 = vmatpush.bf16.msra.mxu0 %v653
    %954 = vmatpush.bf16.msra.mxu0 %v649
    %955 = vmatpush.bf16.msra.mxu0 %v645
    %956 = vmatpush.bf16.msra.mxu0 %v641
    %957 = vmatpush.bf16.msra.mxu0 %v637
    %958 = vmatpush.bf16.msra.mxu0 %v633
    %959 = vmatpush.bf16.msra.mxu0 %v629
    %960 = vmatpush.bf16.msra.mxu0 %v625
    %961 = vmatmul.bf16.gmra.mxu0 %v926
    %v962 = vpop.f32.mrf.mxu0
    %v963 = vadd.f32 0.0, %v962
    %v964 = vpop.f32.mrf.mxu0
    %965 = vdwg.mxu0
    %966 = vmatpush.bf16.msra.mxu0 %v654
    %967 = vmatpush.bf16.msra.mxu0 %v650
    %968 = vmatpush.bf16.msra.mxu0 %v646
    %969 = vmatpush.bf16.msra.mxu0 %v642
    %970 = vmatpush.bf16.msra.mxu0 %v638
    %971 = vmatpush.bf16.msra.mxu0 %v634
    %972 = vmatpush.bf16.msra.mxu0 %v630
    %973 = vmatpush.bf16.msra.mxu0 %v626
    %974 = vmatmul.bf16.gmra.mxu0 %v926
    %v975 = vpop.f32.mrf.mxu0
    %v976 = vadd.f32 0.0, %v975
    %v977 = vpop.f32.mrf.mxu0
    %978 = vdwg.mxu0
    %v979 = vadd.f32 %v922, %v937
    %v980 = vadd.f32 %v923, %v950
    %v981 = vadd.f32 %v924, %v963
    %v982 = vadd.f32 %v925, %v976
    %v983 = vmul.f32 %v979, 0.5
    %v984 = vtanh.pop %v983
    %v985 = vadd.f32 %v984, 1.0
    %v986 = vmul.f32 %v985, 0.5
    %v987 = vmul.f32 %v980, 0.5
    %v988 = vtanh.pop %v987
    %v989 = vadd.f32 %v988, 1.0
    %v990 = vmul.f32 %v989, 0.5
    %v991 = vtanh.pop %v981
    %v992 = vmul.f32 %v982, 0.5
    %v993 = vtanh.pop %v992
    %v994 = vadd.f32 %v993, 1.0
    %v995 = vmul.f32 %v994, 0.5
    %v996 = vmul.f32 %v990, %v918
    %v997 = vmul.f32 %v986, %v991
    %v998 = vadd.f32 %v996, %v997
    %v999 = vtanh.pop %v998
    %v1000 = vmul.f32 %v995, %v999
    %s1001 = scalar_lea.vmem [#allocation2], 128
    %v1002 = vld [vmem:[%s1001] sm:$0xff]
    %v1003 = vld [vmem:[%s1001 + $0x8] sm:$0xff]
    %v1004 = vld [vmem:[%s1001 + $0x10] sm:$0xff]
    %v1005 = vld [vmem:[%s1001 + $0x18] sm:$0xff]
    %v1006 = vpack.c.bf16 %v1000, %v1000
    %1007 = vmatpush.bf16.msra.mxu0 %v651
    %1008 = vmatpush.bf16.msra.mxu0 %v647
    %1009 = vmatpush.bf16.msra.mxu0 %v643
    %1010 = vmatpush.bf16.msra.mxu0 %v639
    %1011 = vmatpush.bf16.msra.mxu0 %v635
    %1012 = vmatpush.bf16.msra.mxu0 %v631
    %1013 = vmatpush.bf16.msra.mxu0 %v627
    %1014 = vmatpush.bf16.msra.mxu0 %v623
    %1015 = vmatmul.bf16.gmra.mxu0 %v1006
    %v1016 = vpop.f32.mrf.mxu0
    %v1017 = vadd.f32 0.0, %v1016
    %v1018 = vpop.f32.mrf.mxu0
    %1019 = vdwg.mxu0
    %1020 = vmatpush.bf16.msra.mxu0 %v652
    %1021 = vmatpush.bf16.msra.mxu0 %v648
    %1022 = vmatpush.bf16.msra.mxu0 %v644
    %1023 = vmatpush.bf16.msra.mxu0 %v640
    %1024 = vmatpush.bf16.msra.mxu0 %v636
    %1025 = vmatpush.bf16.msra.mxu0 %v632
    %1026 = vmatpush.bf16.msra.mxu0 %v628
    %1027 = vmatpush.bf16.msra.mxu0 %v624
    %1028 = vmatmul.bf16.gmra.mxu0 %v1006
    %v1029 = vpop.f32.mrf.mxu0
    %v1030 = vadd.f32 0.0, %v1029
    %v1031 = vpop.f32.mrf.mxu0
    %1032 = vdwg.mxu0
    %1033 = vmatpush.bf16.msra.mxu0 %v653
    %1034 = vmatpush.bf16.msra.mxu0 %v649
    %1035 = vmatpush.bf16.msra.mxu0 %v645
    %1036 = vmatpush.bf16.msra.mxu0 %v641
    %1037 = vmatpush.bf16.msra.mxu0 %v637
    %1038 = vmatpush.bf16.msra.mxu0 %v633
    %1039 = vmatpush.bf16.msra.mxu0 %v629
    %1040 = vmatpush.bf16.msra.mxu0 %v625
    %1041 = vmatmul.bf16.gmra.mxu0 %v1006
    %v1042 = vpop.f32.mrf.mxu0
    %v1043 = vadd.f32 0.0, %v1042
    %v1044 = vpop.f32.mrf.mxu0
    %1045 = vdwg.mxu0
    %1046 = vmatpush.bf16.msra.mxu0 %v654
    %1047 = vmatpush.bf16.msra.mxu0 %v650
    %1048 = vmatpush.bf16.msra.mxu0 %v646
    %1049 = vmatpush.bf16.msra.mxu0 %v642
    %1050 = vmatpush.bf16.msra.mxu0 %v638
    %1051 = vmatpush.bf16.msra.mxu0 %v634
    %1052 = vmatpush.bf16.msra.mxu0 %v630
    %1053 = vmatpush.bf16.msra.mxu0 %v626
    %1054 = vmatmul.bf16.gmra.mxu0 %v1006
    %v1055 = vpop.f32.mrf.mxu0
    %v1056 = vadd.f32 0.0, %v1055
    %v1057 = vpop.f32.mrf.mxu0
    %1058 = vdwg.mxu0
    %v1059 = vadd.f32 %v1002, %v1017
    %v1060 = vadd.f32 %v1003, %v1030
    %v1061 = vadd.f32 %v1004, %v1043
    %v1062 = vadd.f32 %v1005, %v1056
    %v1063 = vmul.f32 %v1059, 0.5
    %v1064 = vtanh.pop %v1063
    %v1065 = vadd.f32 %v1064, 1.0
    %v1066 = vmul.f32 %v1065, 0.5
    %v1067 = vmul.f32 %v1060, 0.5
    %v1068 = vtanh.pop %v1067
    %v1069 = vadd.f32 %v1068, 1.0
    %v1070 = vmul.f32 %v1069, 0.5
    %v1071 = vtanh.pop %v1061
    %v1072 = vmul.f32 %v1062, 0.5
    %v1073 = vtanh.pop %v1072
    %v1074 = vadd.f32 %v1073, 1.0
    %v1075 = vmul.f32 %v1074, 0.5
    %v1076 = vmul.f32 %v1070, %v998
    %v1077 = vmul.f32 %v1066, %v1071
    %v1078 = vadd.f32 %v1076, %v1077
    %v1079 = vtanh.pop %v1078
    %v1080 = vmul.f32 %v1075, %v1079
    %s1081 = scalar_lea.vmem [#allocation2], 160
    %v1082 = vld [vmem:[%s1081] sm:$0xff]
    %v1083 = vld [vmem:[%s1081 + $0x8] sm:$0xff]
    %v1084 = vld [vmem:[%s1081 + $0x10] sm:$0xff]
    %v1085 = vld [vmem:[%s1081 + $0x18] sm:$0xff]
    %v1086 = vpack.c.bf16 %v1080, %v1080
    %1087 = vmatpush.bf16.msra.mxu0 %v651
    %1088 = vmatpush.bf16.msra.mxu0 %v647
    %1089 = vmatpush.bf16.msra.mxu0 %v643
    %1090 = vmatpush.bf16.msra.mxu0 %v639
    %1091 = vmatpush.bf16.msra.mxu0 %v635
    %1092 = vmatpush.bf16.msra.mxu0 %v631
    %1093 = vmatpush.bf16.msra.mxu0 %v627
    %1094 = vmatpush.bf16.msra.mxu0 %v623
    %1095 = vmatmul.bf16.gmra.mxu0 %v1086
    %v1096 = vpop.f32.mrf.mxu0
    %v1097 = vadd.f32 0.0, %v1096
    %v1098 = vpop.f32.mrf.mxu0
    %1099 = vdwg.mxu0
    %1100 = vmatpush.bf16.msra.mxu0 %v652
    %1101 = vmatpush.bf16.msra.mxu0 %v648
    %1102 = vmatpush.bf16.msra.mxu0 %v644
    %1103 = vmatpush.bf16.msra.mxu0 %v640
    %1104 = vmatpush.bf16.msra.mxu0 %v636
    %1105 = vmatpush.bf16.msra.mxu0 %v632
    %1106 = vmatpush.bf16.msra.mxu0 %v628
    %1107 = vmatpush.bf16.msra.mxu0 %v624
    %1108 = vmatmul.bf16.gmra.mxu0 %v1086
    %v1109 = vpop.f32.mrf.mxu0
    %v1110 = vadd.f32 0.0, %v1109
    %v1111 = vpop.f32.mrf.mxu0
    %1112 = vdwg.mxu0
    %1113 = vmatpush.bf16.msra.mxu0 %v653
    %1114 = vmatpush.bf16.msra.mxu0 %v649
    %1115 = vmatpush.bf16.msra.mxu0 %v645
    %1116 = vmatpush.bf16.msra.mxu0 %v641
    %1117 = vmatpush.bf16.msra.mxu0 %v637
    %1118 = vmatpush.bf16.msra.mxu0 %v633
    %1119 = vmatpush.bf16.msra.mxu0 %v629
    %1120 = vmatpush.bf16.msra.mxu0 %v625
    %1121 = vmatmul.bf16.gmra.mxu0 %v1086
    %v1122 = vpop.f32.mrf.mxu0
    %v1123 = vadd.f32 0.0, %v1122
    %v1124 = vpop.f32.mrf.mxu0
    %1125 = vdwg.mxu0
    %1126 = vmatpush.bf16.msra.mxu0 %v654
    %1127 = vmatpush.bf16.msra.mxu0 %v650
    %1128 = vmatpush.bf16.msra.mxu0 %v646
    %1129 = vmatpush.bf16.msra.mxu0 %v642
    %1130 = vmatpush.bf16.msra.mxu0 %v638
    %1131 = vmatpush.bf16.msra.mxu0 %v634
    %1132 = vmatpush.bf16.msra.mxu0 %v630
    %1133 = vmatpush.bf16.msra.mxu0 %v626
    %1134 = vmatmul.bf16.gmra.mxu0 %v1086
    %v1135 = vpop.f32.mrf.mxu0
    %v1136 = vadd.f32 0.0, %v1135
    %v1137 = vpop.f32.mrf.mxu0
    %1138 = vdwg.mxu0
    %v1139 = vadd.f32 %v1082, %v1097
    %v1140 = vadd.f32 %v1083, %v1110
    %v1141 = vadd.f32 %v1084, %v1123
    %v1142 = vadd.f32 %v1085, %v1136
    %v1143 = vmul.f32 %v1139, 0.5
    %v1144 = vtanh.pop %v1143
    %v1145 = vadd.f32 %v1144, 1.0
    %v1146 = vmul.f32 %v1145, 0.5
    %v1147 = vmul.f32 %v1140, 0.5
    %v1148 = vtanh.pop %v1147
    %v1149 = vadd.f32 %v1148, 1.0
    %v1150 = vmul.f32 %v1149, 0.5
    %v1151 = vtanh.pop %v1141
    %v1152 = vmul.f32 %v1142, 0.5
    %v1153 = vtanh.pop %v1152
    %v1154 = vadd.f32 %v1153, 1.0
    %v1155 = vmul.f32 %v1154, 0.5
    %v1156 = vmul.f32 %v1150, %v1078
    %v1157 = vmul.f32 %v1146, %v1151
    %v1158 = vadd.f32 %v1156, %v1157
    %v1159 = vtanh.pop %v1158
    %v1160 = vmul.f32 %v1155, %v1159
    %s1161 = scalar_lea.vmem [#allocation2], 192
    %v1162 = vld [vmem:[%s1161] sm:$0xff]
    %v1163 = vld [vmem:[%s1161 + $0x8] sm:$0xff]
    %v1164 = vld [vmem:[%s1161 + $0x10] sm:$0xff]
    %v1165 = vld [vmem:[%s1161 + $0x18] sm:$0xff]
    %v1166 = vpack.c.bf16 %v1160, %v1160
    %1167 = vmatpush.bf16.msra.mxu0 %v651
    %1168 = vmatpush.bf16.msra.mxu0 %v647
    %1169 = vmatpush.bf16.msra.mxu0 %v643
    %1170 = vmatpush.bf16.msra.mxu0 %v639
    %1171 = vmatpush.bf16.msra.mxu0 %v635
    %1172 = vmatpush.bf16.msra.mxu0 %v631
    %1173 = vmatpush.bf16.msra.mxu0 %v627
    %1174 = vmatpush.bf16.msra.mxu0 %v623
    %1175 = vmatmul.bf16.gmra.mxu0 %v1166
    %v1176 = vpop.f32.mrf.mxu0
    %v1177 = vadd.f32 0.0, %v1176
    %v1178 = vpop.f32.mrf.mxu0
    %1179 = vdwg.mxu0
    %1180 = vmatpush.bf16.msra.mxu0 %v652
    %1181 = vmatpush.bf16.msra.mxu0 %v648
    %1182 = vmatpush.bf16.msra.mxu0 %v644
    %1183 = vmatpush.bf16.msra.mxu0 %v640
    %1184 = vmatpush.bf16.msra.mxu0 %v636
    %1185 = vmatpush.bf16.msra.mxu0 %v632
    %1186 = vmatpush.bf16.msra.mxu0 %v628
    %1187 = vmatpush.bf16.msra.mxu0 %v624
    %1188 = vmatmul.bf16.gmra.mxu0 %v1166
    %v1189 = vpop.f32.mrf.mxu0
    %v1190 = vadd.f32 0.0, %v1189
    %v1191 = vpop.f32.mrf.mxu0
    %1192 = vdwg.mxu0
    %1193 = vmatpush.bf16.msra.mxu0 %v653
    %1194 = vmatpush.bf16.msra.mxu0 %v649
    %1195 = vmatpush.bf16.msra.mxu0 %v645
    %1196 = vmatpush.bf16.msra.mxu0 %v641
    %1197 = vmatpush.bf16.msra.mxu0 %v637
    %1198 = vmatpush.bf16.msra.mxu0 %v633
    %1199 = vmatpush.bf16.msra.mxu0 %v629
    %1200 = vmatpush.bf16.msra.mxu0 %v625
    %1201 = vmatmul.bf16.gmra.mxu0 %v1166
    %v1202 = vpop.f32.mrf.mxu0
    %v1203 = vadd.f32 0.0, %v1202
    %v1204 = vpop.f32.mrf.mxu0
    %1205 = vdwg.mxu0
    %1206 = vmatpush.bf16.msra.mxu0 %v654
    %1207 = vmatpush.bf16.msra.mxu0 %v650
    %1208 = vmatpush.bf16.msra.mxu0 %v646
    %1209 = vmatpush.bf16.msra.mxu0 %v642
    %1210 = vmatpush.bf16.msra.mxu0 %v638
    %1211 = vmatpush.bf16.msra.mxu0 %v634
    %1212 = vmatpush.bf16.msra.mxu0 %v630
    %1213 = vmatpush.bf16.msra.mxu0 %v626
    %1214 = vmatmul.bf16.gmra.mxu0 %v1166
    %v1215 = vpop.f32.mrf.mxu0
    %v1216 = vadd.f32 0.0, %v1215
    %v1217 = vpop.f32.mrf.mxu0
    %1218 = vdwg.mxu0
    %v1219 = vadd.f32 %v1162, %v1177
    %v1220 = vadd.f32 %v1163, %v1190
    %v1221 = vadd.f32 %v1164, %v1203
    %v1222 = vadd.f32 %v1165, %v1216
    %v1223 = vmul.f32 %v1219, 0.5
    %v1224 = vtanh.pop %v1223
    %v1225 = vadd.f32 %v1224, 1.0
    %v1226 = vmul.f32 %v1225, 0.5
    %v1227 = vmul.f32 %v1220, 0.5
    %v1228 = vtanh.pop %v1227
    %v1229 = vadd.f32 %v1228, 1.0
    %v1230 = vmul.f32 %v1229, 0.5
    %v1231 = vtanh.pop %v1221
    %v1232 = vmul.f32 %v1222, 0.5
    %v1233 = vtanh.pop %v1232
    %v1234 = vadd.f32 %v1233, 1.0
    %v1235 = vmul.f32 %v1234, 0.5
    %v1236 = vmul.f32 %v1230, %v1158
    %v1237 = vmul.f32 %v1226, %v1231
    %v1238 = vadd.f32 %v1236, %v1237
    %v1239 = vtanh.pop %v1238
    %v1240 = vmul.f32 %v1235, %v1239
    %s1241 = scalar_lea.vmem [#allocation2], 224
    %v1242 = vld [vmem:[%s1241] sm:$0xff]
    %v1243 = vld [vmem:[%s1241 + $0x8] sm:$0xff]
    %v1244 = vld [vmem:[%s1241 + $0x10] sm:$0xff]
    %v1245 = vld [vmem:[%s1241 + $0x18] sm:$0xff]
    %v1246 = vpack.c.bf16 %v1240, %v1240
    %1247 = vmatpush.bf16.msra.mxu0 %v651
    %1248 = vmatpush.bf16.msra.mxu0 %v647
    %1249 = vmatpush.bf16.msra.mxu0 %v643
    %1250 = vmatpush.bf16.msra.mxu0 %v639
    %1251 = vmatpush.bf16.msra.mxu0 %v635
    %1252 = vmatpush.bf16.msra.mxu0 %v631
    %1253 = vmatpush.bf16.msra.mxu0 %v627
    %1254 = vmatpush.bf16.msra.mxu0 %v623
    %1255 = vmatmul.bf16.gmra.mxu0 %v1246
    %v1256 = vpop.f32.mrf.mxu0
    %v1257 = vadd.f32 0.0, %v1256
    %v1258 = vpop.f32.mrf.mxu0
    %1259 = vdwg.mxu0
    %1260 = vmatpush.bf16.msra.mxu0 %v652
    %1261 = vmatpush.bf16.msra.mxu0 %v648
    %1262 = vmatpush.bf16.msra.mxu0 %v644
    %1263 = vmatpush.bf16.msra.mxu0 %v640
    %1264 = vmatpush.bf16.msra.mxu0 %v636
    %1265 = vmatpush.bf16.msra.mxu0 %v632
    %1266 = vmatpush.bf16.msra.mxu0 %v628
    %1267 = vmatpush.bf16.msra.mxu0 %v624
    %1268 = vmatmul.bf16.gmra.mxu0 %v1246
    %v1269 = vpop.f32.mrf.mxu0
    %v1270 = vadd.f32 0.0, %v1269
    %v1271 = vpop.f32.mrf.mxu0
    %1272 = vdwg.mxu0
    %1273 = vmatpush.bf16.msra.mxu0 %v653
    %1274 = vmatpush.bf16.msra.mxu0 %v649
    %1275 = vmatpush.bf16.msra.mxu0 %v645
    %1276 = vmatpush.bf16.msra.mxu0 %v641
    %1277 = vmatpush.bf16.msra.mxu0 %v637
    %1278 = vmatpush.bf16.msra.mxu0 %v633
    %1279 = vmatpush.bf16.msra.mxu0 %v629
    %1280 = vmatpush.bf16.msra.mxu0 %v625
    %1281 = vmatmul.bf16.gmra.mxu0 %v1246
    %v1282 = vpop.f32.mrf.mxu0
    %v1283 = vadd.f32 0.0, %v1282
    %v1284 = vpop.f32.mrf.mxu0
    %1285 = vdwg.mxu0
    %1286 = vmatpush.bf16.msra.mxu0 %v654
    %1287 = vmatpush.bf16.msra.mxu0 %v650
    %1288 = vmatpush.bf16.msra.mxu0 %v646
    %1289 = vmatpush.bf16.msra.mxu0 %v642
    %1290 = vmatpush.bf16.msra.mxu0 %v638
    %1291 = vmatpush.bf16.msra.mxu0 %v634
    %1292 = vmatpush.bf16.msra.mxu0 %v630
    %1293 = vmatpush.bf16.msra.mxu0 %v626
    %1294 = vmatmul.bf16.gmra.mxu0 %v1246
    %v1295 = vpop.f32.mrf.mxu0
    %v1296 = vadd.f32 0.0, %v1295
    %v1297 = vpop.f32.mrf.mxu0
    %1298 = vdwg.mxu0
    %v1299 = vadd.f32 %v1242, %v1257
    %v1300 = vadd.f32 %v1243, %v1270
    %v1301 = vadd.f32 %v1244, %v1283
    %v1302 = vadd.f32 %v1245, %v1296
    %v1303 = vmul.f32 %v1299, 0.5
    %v1304 = vtanh.pop %v1303
    %v1305 = vadd.f32 %v1304, 1.0
    %v1306 = vmul.f32 %v1305, 0.5
    %v1307 = vmul.f32 %v1300, 0.5
    %v1308 = vtanh.pop %v1307
    %v1309 = vadd.f32 %v1308, 1.0
    %v1310 = vmul.f32 %v1309, 0.5
    %v1311 = vtanh.pop %v1301
    %v1312 = vmul.f32 %v1302, 0.5
    %v1313 = vtanh.pop %v1312
    %v1314 = vadd.f32 %v1313, 1.0
    %v1315 = vmul.f32 %v1314, 0.5
    %v1316 = vmul.f32 %v1310, %v1238
    %v1317 = vmul.f32 %v1306, %v1311
    %v1318 = vadd.f32 %v1316, %v1317
    %v1319 = vtanh.pop %v1318
    %v1320 = vmul.f32 %v1315, %v1319
    %1321 = vst [vmem:[#allocation3] sm:$0xff] %v1320
    %1322 = vst [vmem:[#allocation4] sm:$0xff] %v1318
    // Predicated region
    $region50: #{tpu_custom_call.1} parent=1 // pred_check
      %p1323 = pneg %p100
    $region51: #{tpu_custom_call.1} parent=1 // pred_check_branch
      %1325 = sbr.rel (%p1323) target = $region53
    $region52: #{tpu_custom_call.1} parent=1 // pred_region
      %v1326 = vpack.c.bf16 %v1320, %v1320
      %v1327 = vld [vmem:[#allocation13] sm:$0xf]
      %v1328 = vld [vmem:[#allocation13 + $0x4] sm:$0xf]
      %v1329 = vld [vmem:[#allocation13 + $0x8] sm:$0xf]
      %v1330 = vld [vmem:[#allocation13 + $0xc] sm:$0xf]
      %v1331 = vld [vmem:[#allocation13 + $0x10] sm:$0xf]
      %v1332 = vld [vmem:[#allocation13 + $0x14] sm:$0xf]
      %v1333 = vld [vmem:[#allocation13 + $0x18] sm:$0xf]
      %v1334 = vld [vmem:[#allocation13 + $0x1c] sm:$0xf]
      %v1335 = vld [vmem:[#allocation13 + $0x20] sm:$0xf]
      %v1336 = vld [vmem:[#allocation13 + $0x24] sm:$0xf]
      %v1337 = vld [vmem:[#allocation13 + $0x28] sm:$0xf]
      %v1338 = vld [vmem:[#allocation13 + $0x2c] sm:$0xf]
      %v1339 = vld [vmem:[#allocation13 + $0x30] sm:$0xf]
      %v1340 = vld [vmem:[#allocation13 + $0x34] sm:$0xf]
      %v1341 = vld [vmem:[#allocation13 + $0x38] sm:$0xf]
      %v1342 = vld [vmem:[#allocation13 + $0x3c] sm:$0xf]
      %v1343 = vld [vmem:[%s5] sm:$0x1]
      %v1345 = vperm.slane %v1343, 0
      %v1363 = vunpack.c.l.b16 %v1327
      %v1364 = vunpack.c.l.b16 %v1328
      %v1365 = vunpack.c.l.b16 %v1329
      %v1366 = vunpack.c.l.b16 %v1330
      %v1367 = vunpack.c.l.b16 %v1331
      %v1368 = vunpack.c.l.b16 %v1332
      %v1369 = vunpack.c.l.b16 %v1333
      %v1370 = vunpack.c.l.b16 %v1334
      %v1371 = vunpack.c.l.b16 %v1335
      %v1372 = vunpack.c.l.b16 %v1336
      %v1373 = vunpack.c.l.b16 %v1337
      %v1374 = vunpack.c.l.b16 %v1338
      %v1375 = vunpack.c.l.b16 %v1339
      %v1376 = vunpack.c.l.b16 %v1340
      %v1377 = vunpack.c.l.b16 %v1341
      %v1378 = vunpack.c.l.b16 %v1342
      %v1379 = vpack.c.b16 %v1364, %v1363
      %v1380 = vpack.c.b16 %v1366, %v1365
      %v1381 = vpack.c.b16 %v1368, %v1367
      %v1382 = vpack.c.b16 %v1370, %v1369
      %v1383 = vpack.c.b16 %v1372, %v1371
      %v1384 = vpack.c.b16 %v1374, %v1373
      %v1385 = vpack.c.b16 %v1376, %v1375
      %v1386 = vpack.c.b16 %v1378, %v1377
      %1395 = vmatpush.bf16.msra.mxu0 %v1386
      %1396 = vmatpush.bf16.msra.mxu0 %v1385
      %1397 = vmatpush.bf16.msra.mxu0 %v1384
      %1398 = vmatpush.bf16.msra.mxu0 %v1383
      %1399 = vmatpush.bf16.msra.mxu0 %v1382
      %1400 = vmatpush.bf16.msra.mxu0 %v1381
      %1401 = vmatpush.bf16.msra.mxu0 %v1380
      %1402 = vmatpush.bf16.msra.mxu0 %v1379
      %1403 = vmatmul.bf16.gmra.mxu0 %v1326
      %v1404 = vpop.f32.mrf.mxu0
      %v1405 = vadd.f32 %v1345, %v1404
      %v1406 = vpop.f32.mrf.mxu0
      %1407 = vdwg.mxu0
      %1408 = vst [vmem:[#allocation14] sm:$0xff] %v1405
    $region53: #{tpu_custom_call.1} parent=1 // pred_fallthru
      _
    // Predicated region
    $region54: #{tpu_custom_call.1} parent=1 // pred_check
      _
    $region55: #{tpu_custom_call.1} parent=1 // pred_check_branch
      %1410 = sbr.rel (0) target = $region57
    $region56: #{tpu_custom_call.1} parent=1 // pred_region
      %1412 = vsyncadd [#allocation7], 0
      %s1414 = sshll.u32 [#allocation14], 4
      %s1415 = int_to_ptr.vmem [resolvable:$true] %s1414
      %s1416 = sshll.u32 %s6, 4
      %s1417 = int_to_ptr.hbm [resolvable:$true] %s1416
      %1419 = dma.vmem_to_hbm [thread:$0]  %s1415, 128, %s1417, [#allocation7]
    $region57: #{tpu_custom_call.1} parent=1 // pred_fallthru
      _
    // Predicated region
    $region58: #{tpu_custom_call.1} parent=1 // pred_check
      _
    $region59: #{tpu_custom_call.1} parent=1 // pred_check_branch
      %1421 = sbr.rel (0) target = $region61
    $region60: #{tpu_custom_call.1} parent=1 // pred_region
      %1423 = dma.done [#allocation7], 128
    $region61: #{tpu_custom_call.1} parent=1 // pred_fallthru
      _
    %1424 = vsyncpa [#allocation6], 1
    %1425 = vsyncpa [#allocation9], 1
    %1426 = vsyncpa [#allocation12], 1
    %1427 = vsyncpa [#allocation7], 1

</llo_original>
